<compile_context>
chip_gen: v7x
topology: tpu7x:2x2x1
jax: 0.10.0
libtpu: 0.0.40
codegen_flags: <defaults>
</compile_context>

<pallas_src>
import math
import functools

import jax
import jax.numpy as jnp
from jax import lax
from jax.experimental import pallas as pl
from jax.experimental.pallas import tpu as pltpu


# ----------------------------- in-kernel helpers ------------------------------

def _layernorm(v, w, b, eps=1e-5):
    # v: (rows, E) f32 ; w, b: (1, E) f32
    mu = jnp.mean(v, axis=-1, keepdims=True)
    var = jnp.mean((v - mu) * (v - mu), axis=-1, keepdims=True)
    return (v - mu) * lax.rsqrt(var + eps) * w + b


def _new_gelu(x):
    c = math.sqrt(2.0 / math.pi)
    return 0.5 * x * (1.0 + jnp.tanh(c * (x + 0.044715 * x * x * x)))


# ------------------ kernel 1: LN1 + fused QKV projection ----------------------

def ln_qkv_kernel(x_ref, ln1w_ref, ln1b_ref, wqkv_ref, bqkv_ref,
                  q_ref, k_ref, v_ref):
    f32, bf16 = jnp.float32, jnp.bfloat16
    x = x_ref[...].astype(f32)                                  # (tq, E)
    E = x.shape[1]
    h = _layernorm(x, ln1w_ref[...], ln1b_ref[...]).astype(bf16)
    # One fused (tq, 3E) matmul; slices below are static and lane-aligned
    # whenever E is a multiple of 128.
    qkv = (jnp.dot(h, wqkv_ref[...], preferred_element_type=f32)
           + bqkv_ref[...]).astype(bf16)                        # (tq, 3E)
    q_ref[...] = qkv[:, :E]
    k_ref[...] = qkv[:, E:2 * E]
    v_ref[...] = qkv[:, 2 * E:]


# ------- kernel 2: causal (skipped) attention + proj + residual + MLP ---------

def attn_mlp_kernel(x_ref, q_ref, k_ref, v_ref,
                    wproj_ref, bproj_ref, ln2w_ref, ln2b_ref,
                    wfc_ref, bfc_ref, wmp_ref, bmp_ref,
                    out_ref, y_acc_ref, *, n_head, mlp_chunk):
    f32, bf16 = jnp.float32, jnp.bfloat16
    qi = pl.program_id(1)                                       # query-tile idx

    x = x_ref[...].astype(f32)                                  # (tq, E)
    tq, E = x.shape
    hd = E // n_head
    scale = 1.0 / math.sqrt(hd)

    q_all = q_ref[...]                                          # (tq, E) bf16
    q_heads = [q_all[:, h * hd:(h + 1) * hd] for h in range(n_head)]

    # Causal mask for the DIAGONAL KV tile only (tk == tq).  Strictly-past
    # tiles need no masking; strictly-future tiles are skipped entirely below.
    row_l = lax.broadcasted_iota(jnp.int32, (tq, tq), 0)
    col_l = lax.broadcasted_iota(jnp.int32, (tq, tq), 1)
    diag_mask = col_l <= row_l

    contract_hd = (((1,), (1,)), ((), ()))                      # q @ k^T, no transpose
    n_kv = qi + 1                                               # causal skip

    def kv_step(kj, carry):
        start = pl.multiple_of(kj * tq, tq)
        k_blk = k_ref[pl.ds(start, tq), :]                      # (tq, E) bf16
        v_blk = v_ref[pl.ds(start, tq), :]                      # (tq, E) bf16
        # Off-diagonal (past) tiles: keep everything (one scalar OR per tile).
        keep = jnp.logical_or(kj < qi, diag_mask)
        new_carry = []
        for h in range(n_head):                                 # static lane slices
            sl = slice(h * hd, (h + 1) * hd)
            m, l, acc = carry[h]
            s = lax.dot_general(q_heads[h], k_blk[:, sl], contract_hd,
                                preferred_element_type=f32) * scale   # (tq, tq)
            s = jnp.where(keep, s, -jnp.inf)
            m_new = jnp.maximum(m, jnp.max(s, axis=-1, keepdims=True))
            alpha = jnp.exp(m - m_new)
            p = jnp.exp(s - m_new)
            l_new = alpha * l + jnp.sum(p, axis=-1, keepdims=True)
            acc_new = alpha * acc + jnp.dot(p.astype(bf16), v_blk[:, sl],
                                            preferred_element_type=f32)
            new_carry.append((m_new, l_new, acc_new))
        return tuple(new_carry)

    init = tuple((jnp.full((tq, 1), -jnp.inf, f32),
                  jnp.zeros((tq, 1), f32),
                  jnp.zeros((tq, hd), f32)) for _ in range(n_head))
    final = lax.fori_loop(0, n_kv, kv_step, init)

    for h in range(n_head):
        sl = slice(h * hd, (h + 1) * hd)
        m, l, acc = final[h]
        # bf16 scratch write (value immediately feeds a bf16 matmul).
        y_acc_ref[:, sl] = (acc * pl.reciprocal(l, approx=True)).astype(bf16)

    y = y_acc_ref[...]                                          # (tq, E) bf16
    attn = jnp.dot(y, wproj_ref[...], preferred_element_type=f32) + bproj_ref[...]
    x1 = x + attn                                               # residual 1

    # ---- MLP branch (hidden dim chunked; remainder chunks handled) ----------
    h2 = _layernorm(x1, ln2w_ref[...], ln2b_ref[...]).astype(bf16)
    H = wfc_ref.shape[1]                                        # 4E
    ff = jnp.zeros((tq, E), f32)
    for c in range(0, H, mlp_chunk):
        n = min(mlp_chunk, H - c)
        blk = (jnp.dot(h2, wfc_ref[:, c:c + n], preferred_element_type=f32)
               + bfc_ref[:, c:c + n])
        blk = _new_gelu(blk).astype(bf16)
        ff = ff + jnp.dot(blk, wmp_ref[c:c + n, :], preferred_element_type=f32)

    out_ref[...] = (x1 + ff + bmp_ref[...]).astype(out_ref.dtype)   # residual 2


# --------------------------------- wrapper ------------------------------------

def _pick_tile(T):
    for cand in (256, 128, 64, 32, 16, 8):
        if T % cand == 0:
            return cand
    return T


def _default_vmem_limit_bytes():
    # ~75% of physical VMEM: ≈96 MiB on v5e/v6e (128 MiB), ≈48 MiB on v7x (64 MiB).
    try:
        cap = pltpu.get_tpu_info().vmem_capacity_bytes
        return int(cap * 3 // 4)
    except Exception:
        return 48 * 1024 * 1024


def _const_spec(shape, single_buffer):
    index_map = lambda *_: (0,) * len(shape)
    if single_buffer:
        # Weights/biases never change across grid steps -> single buffer.
        return pl.BlockSpec(shape, index_map,
                            pipeline_mode=pl.Buffered(buffer_count=1))
    return pl.BlockSpec(shape, index_map)


def decoder_block(x, params, n_head, *, tq=None, single_buffer_weights=True,
                  vmem_limit_bytes=None):
    B, T, E = x.shape
    assert E % n_head == 0
    if tq is None:
        tq = _pick_tile(T)           # big tiles amortize per-step overhead
    assert T % tq == 0
    nq = T // tq

    bf16 = jnp.bfloat16
    w_qkv = params["w_qkv"].astype(bf16)          # fused (E, 3E)
    w_proj = params["w_proj"].astype(bf16)
    w_fc = params["w_fc"].astype(bf16)
    w_mp = params["w_mproj"].astype(bf16)

    if vmem_limit_bytes is None:
        vmem_limit_bytes = _default_vmem_limit_bytes()
    compiler_params = pltpu.CompilerParams(
        dimension_semantics=("parallel", "parallel"),
        vmem_limit_bytes=vmem_limit_bytes)

    cs = functools.partial(_const_spec, single_buffer=single_buffer_weights)
    tile = pl.BlockSpec((None, tq, E), lambda b, i: (b, i, 0))
    kv_idx = lambda b, i: (b, 0, 0)
    if single_buffer_weights:
        # K/V block index only changes with b -> single buffer halves footprint.
        full_seq = pl.BlockSpec((None, T, E), kv_idx,
                                pipeline_mode=pl.Buffered(buffer_count=1))
    else:
        full_seq = pl.BlockSpec((None, T, E), kv_idx)

    # ---- pass 1: LN1 + fused QKV projection ----------------------------------
    qkv_shape = jax.ShapeDtypeStruct((B, T, E), bf16)
    q, k, v = pl.pallas_call(
        ln_qkv_kernel,
        out_shape=(qkv_shape, qkv_shape, qkv_shape),
        grid_spec=pltpu.PrefetchScalarGridSpec(
            num_scalar_prefetch=0,
            grid=(B, nq),
            in_specs=[tile,                                   # x
                      cs((1, E)), cs((1, E)),                 # ln1 w, b
                      cs((E, 3 * E)), cs((1, 3 * E))],        # fused W_qkv, b_qkv
            out_specs=(tile, tile, tile),
        ),
        compiler_params=compiler_params,
        cost_estimate=pl.CostEstimate(
            flops=6 * B * T * E * E,
            transcendentals=0,
            bytes_accessed=10 * B * T * E + 8 * E * E),
    )(x, params["ln1_w"], params["ln1_b"], w_qkv, params["b_qkv"])

    # ---- pass 2: causal attention + proj + residual + LN2 + MLP + residual ---
    mlp_chunk = min(4 * E, 512)
    out = pl.pallas_call(
        functools.partial(attn_mlp_kernel, n_head=n_head, mlp_chunk=mlp_chunk),
        out_shape=jax.ShapeDtypeStruct((B, T, E), x.dtype),
        grid_spec=pltpu.PrefetchScalarGridSpec(
            num_scalar_prefetch=0,
            grid=(B, nq),
            in_specs=[tile,                                   # x (residual)
                      tile,                                   # q (query tile)
                      full_seq, full_seq,                     # k, v (full seq)
                      cs((E, E)), cs((1, E)),                 # attn proj W, b
                      cs((1, E)), cs((1, E)),                 # ln2 w, b
                      cs((E, 4 * E)), cs((1, 4 * E)),         # mlp fc  W, b
                      cs((4 * E, E)), cs((1, E))],            # mlp proj W, b
            out_specs=tile,
            scratch_shapes=[pltpu.VMEM((tq, E), jnp.bfloat16)],
        ),
        compiler_params=compiler_params,
        cost_estimate=pl.CostEstimate(
            # causal: ~half of full-T attention flops / exp
            flops=B * (2 * T * T * E + 18 * T * E * E),
            transcendentals=B * (n_head * T * T // 2 + 4 * T * E),
            # includes per-batch full K/V reads (+4*B*T*E bf16 bytes)
            bytes_accessed=14 * B * T * E + 18 * E * E),
    )(x, q, k, v,
      w_proj, params["b_proj"], params["ln2_w"], params["ln2_b"],
      w_fc, params["b_fc"], w_mp, params["b_mproj"])
    return out


# ------------------------ pure-JAX reference (bf16 matmuls) -------------------

def decoder_block_ref(x, params, n_head):
    B, T, E = x.shape
    hd = E // n_head
    bf = jnp.bfloat16

    def ln(v, w, b):
        mu = jnp.mean(v, axis=-1, keepdims=True)
        var = jnp.mean((v - mu) ** 2, axis=-1, keepdims=True)
        return (v - mu) / jnp.sqrt(var + 1e-5) * w[0] + b[0]

    def mm(a, w):   # bf16 operands, f32 accumulation (mirrors the kernel)
        return jnp.dot(a.astype(bf), w.astype(bf),
                       preferred_element_type=jnp.float32)

    h = ln(x, params["ln1_w"], params["ln1_b"])
    wq, wk, wv = jnp.split(params["w_qkv"], 3, axis=1)
    bq, bk, bv = jnp.split(params["b_qkv"], 3, axis=1)
    q = (mm(h, wq) + bq).astype(bf)
    k = (mm(h, wk) + bk).astype(bf)
    v = (mm(h, wv) + bv).astype(bf)
    q = q.reshape(B, T, n_head, hd).transpose(0, 2, 1, 3)
    k = k.reshape(B, T, n_head, hd).transpose(0, 2, 1, 3)
    v = v.reshape(B, T, n_head, hd).transpose(0, 2, 1, 3)
    att = jnp.einsum("bhqd,bhkd->bhqk", q, k,
                     preferred_element_type=jnp.float32) / math.sqrt(hd)
    mask = jnp.tril(jnp.ones((T, T), bool))
    att = jnp.where(mask, att, -jnp.inf)
    att = jax.nn.softmax(att, axis=-1)
    y = jnp.einsum("bhqk,bhkd->bhqd", att.astype(bf), v,
                   preferred_element_type=jnp.float32)
    y = y.transpose(0, 2, 1, 3).reshape(B, T, E)
    y = mm(y, params["w_proj"]) + params["b_proj"][0]
    x1 = x + y

    h2 = ln(x1, params["ln2_w"], params["ln2_b"])
    ff = mm(h2, params["w_fc"]) + params["b_fc"][0]
    ff = 0.5 * ff * (1.0 + jnp.tanh(math.sqrt(2.0 / math.pi)
                                    * (ff + 0.044715 * ff ** 3)))
    ff = mm(ff, params["w_mproj"]) + params["b_mproj"][0]
    return x1 + ff


# ----------------------------------- main --------------------------------------

if __name__ == "__main__":
    B, T, E = 2, 8, 32
    n_head = 4

    keys = jax.random.split(jax.random.PRNGKey(0), 9)

    params = {
        # LayerNorm: PyTorch init (ones / zeros)
        "ln1_w": jnp.ones((1, E), jnp.float32),
        "ln1_b": jnp.zeros((1, E), jnp.float32),
        "ln2_w": jnp.ones((1, E), jnp.float32),
        "ln2_b": jnp.zeros((1, E), jnp.float32),
        # Linear weights stored as (in, out)  ==  torch_weight.T
        "w_qkv":   0.02 * jax.random.normal(keys[0], (E, 3 * E), jnp.float32),
        "b_qkv":   0.01 * jax.random.normal(keys[1], (1, 3 * E), jnp.float32),
        "w_proj":  0.02 * jax.random.normal(keys[2], (E, E), jnp.float32),
        "b_proj":  0.01 * jax.random.normal(keys[3], (1, E), jnp.float32),
        "w_fc":    0.02 * jax.random.normal(keys[4], (E, 4 * E), jnp.float32),
        "b_fc":    0.01 * jax.random.normal(keys[5], (1, 4 * E), jnp.float32),
        "w_mproj": 0.02 * jax.random.normal(keys[6], (4 * E, E), jnp.float32),
        "b_mproj": 0.01 * jax.random.normal(keys[7], (1, E), jnp.float32),
    }

    x = jax.random.normal(keys[8], (B, T, E), jnp.float32)

    try:
        out = jax.block_until_ready(decoder_block(x, params, n_head))
    except Exception:
        # Fallback if this jax version rejects pl.Buffered(1) on pallas_call
        # BlockSpecs; identical kernels, default (double) buffering everywhere.
        out = jax.block_until_ready(
            decoder_block(x, params, n_head, single_buffer_weights=False))

    ref = decoder_block_ref(x, params, n_head)

    assert out.shape == (B, T, E)
    err = jnp.max(jnp.abs(out - ref))
    assert jnp.allclose(out, ref, rtol=5e-3, atol=5e-3), f"max abs err = {err}"

    print("KERNEL_OK")
</pallas_src>

<mosaic_0001>
module attributes {stable_mosaic.version = 11 : i64} {
  func.func @ln_qkv_kernel(%arg0: i32, %arg1: i32, %arg2: memref<1x8x32xf32, #tpu.memory_space<vmem>>, %arg3: memref<1x32xf32, #tpu.memory_space<vmem>>, %arg4: memref<1x32xf32, #tpu.memory_space<vmem>>, %arg5: memref<32x96xbf16, #tpu.memory_space<vmem>>, %arg6: memref<1x96xf32, #tpu.memory_space<vmem>>, %arg7: memref<1x8x32xbf16, #tpu.memory_space<vmem>>, %arg8: memref<1x8x32xbf16, #tpu.memory_space<vmem>>, %arg9: memref<1x8x32xbf16, #tpu.memory_space<vmem>>) attributes {dimension_semantics = [#tpu.dimension_semantics<parallel>, #tpu.dimension_semantics<parallel>], iteration_bounds = array<i64: 2, 1>, scalar_prefetch = 0 : i64, scratch_operands = 0 : i64, tpu.core_type = #tpu.core_type<tc>, window_params = [{transform_indices = @transform_0, window_bounds = array<i64: 1, 8, 32>}, {pipeline_mode = #tpu.pipeline_mode<synchronous>, transform_indices = @transform_1, window_bounds = array<i64: 1, 32>}, {pipeline_mode = #tpu.pipeline_mode<synchronous>, transform_indices = @transform_2, window_bounds = array<i64: 1, 32>}, {pipeline_mode = #tpu.pipeline_mode<synchronous>, transform_indices = @transform_3, window_bounds = array<i64: 32, 96>}, {pipeline_mode = #tpu.pipeline_mode<synchronous>, transform_indices = @transform_4, window_bounds = array<i64: 1, 96>}, {transform_indices = @transform_5, window_bounds = array<i64: 1, 8, 32>}, {transform_indices = @transform_6, window_bounds = array<i64: 1, 8, 32>}, {transform_indices = @transform_7, window_bounds = array<i64: 1, 8, 32>}]} {
    %c0 = arith.constant 0 : index
    %c0_0 = arith.constant 0 : index
    %c0_1 = arith.constant 0 : index
    %0 = vector.load %arg2[%c0, %c0_0, %c0_1] : memref<1x8x32xf32, #tpu.memory_space<vmem>>, vector<1x8x32xf32>
    %1 = vector.shape_cast %0 : vector<1x8x32xf32> to vector<8x32xf32>
    %c0_2 = arith.constant 0 : index
    %c0_3 = arith.constant 0 : index
    %2 = vector.load %arg3[%c0_2, %c0_3] : memref<1x32xf32, #tpu.memory_space<vmem>>, vector<1x32xf32>
    %c0_4 = arith.constant 0 : index
    %c0_5 = arith.constant 0 : index
    %3 = vector.load %arg4[%c0_4, %c0_5] : memref<1x32xf32, #tpu.memory_space<vmem>>, vector<1x32xf32>
    %cst = arith.constant dense<0.000000e+00> : vector<8xf32>
    %4 = vector.multi_reduction <add>, %1, %cst [1] : vector<8x32xf32> to vector<8xf32>
    %5 = vector.shape_cast %4 : vector<8xf32> to vector<8x1xf32>
    %cst_6 = arith.constant 3.200000e+01 : f32
    %6 = vector.broadcast %cst_6 : f32 to vector<8x1xf32>
    %7 = arith.divf %5, %6 : vector<8x1xf32>
    %8 = vector.broadcast %7 : vector<8x1xf32> to vector<8x32xf32>
    %9 = arith.subf %1, %8 : vector<8x32xf32>
    %10 = vector.broadcast %7 : vector<8x1xf32> to vector<8x32xf32>
    %11 = arith.subf %1, %10 : vector<8x32xf32>
    %12 = arith.mulf %9, %11 : vector<8x32xf32>
    %cst_7 = arith.constant dense<0.000000e+00> : vector<8xf32>
    %13 = vector.multi_reduction <add>, %12, %cst_7 [1] : vector<8x32xf32> to vector<8xf32>
    %14 = vector.shape_cast %13 : vector<8xf32> to vector<8x1xf32>
    %cst_8 = arith.constant 3.200000e+01 : f32
    %15 = vector.broadcast %cst_8 : f32 to vector<8x1xf32>
    %16 = arith.divf %14, %15 : vector<8x1xf32>
    %17 = vector.broadcast %7 : vector<8x1xf32> to vector<8x32xf32>
    %18 = arith.subf %1, %17 : vector<8x32xf32>
    %cst_9 = arith.constant 9.99999974E-6 : f32
    %19 = vector.broadcast %cst_9 : f32 to vector<8x1xf32>
    %20 = arith.addf %16, %19 : vector<8x1xf32>
    %21 = math.rsqrt %20 : vector<8x1xf32>
    %22 = vector.broadcast %21 : vector<8x1xf32> to vector<8x32xf32>
    %23 = arith.mulf %18, %22 : vector<8x32xf32>
    %24 = vector.broadcast %2 : vector<1x32xf32> to vector<8x32xf32>
    %25 = arith.mulf %23, %24 : vector<8x32xf32>
    %26 = vector.broadcast %3 : vector<1x32xf32> to vector<8x32xf32>
    %27 = arith.addf %25, %26 : vector<8x32xf32>
    %28 = arith.truncf %27 : vector<8x32xf32> to vector<8x32xbf16>
    %c0_10 = arith.constant 0 : index
    %c0_11 = arith.constant 0 : index
    %29 = vector.load %arg5[%c0_10, %c0_11] : memref<32x96xbf16, #tpu.memory_space<vmem>>, vector<32x96xbf16>
    %cst_12 = arith.constant dense<0.000000e+00> : vector<8x96xf32>
    %30 = tpu.matmul %28, %29, %cst_12 {dimension_numbers = #tpu.dot_dimension_numbers<[1], [0], [0], [1], [0, 0, 1, 1], [], []>} : vector<8x32xbf16>, vector<32x96xbf16>, vector<8x96xf32> -> vector<8x96xf32>
    %c0_13 = arith.constant 0 : index
    %c0_14 = arith.constant 0 : index
    %31 = vector.load %arg6[%c0_13, %c0_14] : memref<1x96xf32, #tpu.memory_space<vmem>>, vector<1x96xf32>
    %32 = vector.broadcast %31 : vector<1x96xf32> to vector<8x96xf32>
    %33 = arith.addf %30, %32 : vector<8x96xf32>
    %34 = arith.truncf %33 : vector<8x96xf32> to vector<8x96xbf16>
    %35 = vector.extract_strided_slice %34 {offsets = [0, 0], sizes = [8, 32], strides = [1, 1]} : vector<8x96xbf16> to vector<8x32xbf16>
    %c0_15 = arith.constant 0 : index
    %c0_16 = arith.constant 0 : index
    %c0_17 = arith.constant 0 : index
    %36 = vector.load %arg7[%c0_15, %c0_16, %c0_17] : memref<1x8x32xbf16, #tpu.memory_space<vmem>>, vector<1x8x32xbf16>
    %37 = vector.shape_cast %36 : vector<1x8x32xbf16> to vector<8x32xbf16>
    %38 = vector.shape_cast %35 : vector<8x32xbf16> to vector<1x8x32xbf16>
    tpu.vector_store %arg7[%c0_15, %c0_16, %c0_17], %38 {strides = array<i32>} : memref<1x8x32xbf16, #tpu.memory_space<vmem>>, vector<1x8x32xbf16>,
    %39 = vector.extract_strided_slice %34 {offsets = [0, 32], sizes = [8, 32], strides = [1, 1]} : vector<8x96xbf16> to vector<8x32xbf16>
    %c0_18 = arith.constant 0 : index
    %c0_19 = arith.constant 0 : index
    %c0_20 = arith.constant 0 : index
    %40 = vector.load %arg8[%c0_18, %c0_19, %c0_20] : memref<1x8x32xbf16, #tpu.memory_space<vmem>>, vector<1x8x32xbf16>
    %41 = vector.shape_cast %40 : vector<1x8x32xbf16> to vector<8x32xbf16>
    %42 = vector.shape_cast %39 : vector<8x32xbf16> to vector<1x8x32xbf16>
    tpu.vector_store %arg8[%c0_18, %c0_19, %c0_20], %42 {strides = array<i32>} : memref<1x8x32xbf16, #tpu.memory_space<vmem>>, vector<1x8x32xbf16>,
    %43 = vector.extract_strided_slice %34 {offsets = [0, 64], sizes = [8, 32], strides = [1, 1]} : vector<8x96xbf16> to vector<8x32xbf16>
    %c0_21 = arith.constant 0 : index
    %c0_22 = arith.constant 0 : index
    %c0_23 = arith.constant 0 : index
    %44 = vector.load %arg9[%c0_21, %c0_22, %c0_23] : memref<1x8x32xbf16, #tpu.memory_space<vmem>>, vector<1x8x32xbf16>
    %45 = vector.shape_cast %44 : vector<1x8x32xbf16> to vector<8x32xbf16>
    %46 = vector.shape_cast %43 : vector<8x32xbf16> to vector<1x8x32xbf16>
    tpu.vector_store %arg9[%c0_21, %c0_22, %c0_23], %46 {strides = array<i32>} : memref<1x8x32xbf16, #tpu.memory_space<vmem>>, vector<1x8x32xbf16>,
    return
  }
  func.func @transform_0(%arg0: i32, %arg1: i32) -> (i32, i32, i32) {
    %c0_i32 = arith.constant 0 : i32
    %c0_i32_0 = arith.constant 0 : i32
    return %arg0, %arg1, %c0_i32 : i32, i32, i32
  }
  func.func @transform_1(%arg0: i32, %arg1: i32) -> (i32, i32) {
    %c0_i32 = arith.constant 0 : i32
    %c0_i32_0 = arith.constant 0 : i32
    %c0_i32_1 = arith.constant 0 : i32
    return %c0_i32, %c0_i32_0 : i32, i32
  }
  func.func @transform_2(%arg0: i32, %arg1: i32) -> (i32, i32) {
    %c0_i32 = arith.constant 0 : i32
    %c0_i32_0 = arith.constant 0 : i32
    %c0_i32_1 = arith.constant 0 : i32
    return %c0_i32, %c0_i32_0 : i32, i32
  }
  func.func @transform_3(%arg0: i32, %arg1: i32) -> (i32, i32) {
    %c0_i32 = arith.constant 0 : i32
    %c0_i32_0 = arith.constant 0 : i32
    %c0_i32_1 = arith.constant 0 : i32
    return %c0_i32, %c0_i32_0 : i32, i32
  }
  func.func @transform_4(%arg0: i32, %arg1: i32) -> (i32, i32) {
    %c0_i32 = arith.constant 0 : i32
    %c0_i32_0 = arith.constant 0 : i32
    %c0_i32_1 = arith.constant 0 : i32
    return %c0_i32, %c0_i32_0 : i32, i32
  }
  func.func @transform_5(%arg0: i32, %arg1: i32) -> (i32, i32, i32) {
    %c0_i32 = arith.constant 0 : i32
    %c0_i32_0 = arith.constant 0 : i32
    return %arg0, %arg1, %c0_i32 : i32, i32, i32
  }
  func.func @transform_6(%arg0: i32, %arg1: i32) -> (i32, i32, i32) {
    %c0_i32 = arith.constant 0 : i32
    %c0_i32_0 = arith.constant 0 : i32
    return %arg0, %arg1, %c0_i32 : i32, i32, i32
  }
  func.func @transform_7(%arg0: i32, %arg1: i32) -> (i32, i32, i32) {
    %c0_i32 = arith.constant 0 : i32
    %c0_i32_0 = arith.constant 0 : i32
    return %arg0, %arg1, %c0_i32 : i32, i32, i32
  }
}

module attributes {stable_mosaic.version = 11 : i64} {
  func.func @ln_qkv_kernel(%arg0: i32, %arg1: i32, %arg2: memref<1x8x32xf32, #tpu.memory_space<vmem>>, %arg3: memref<1x32xf32, #tpu.memory_space<vmem>>, %arg4: memref<1x32xf32, #tpu.memory_space<vmem>>, %arg5: memref<32x96xbf16, #tpu.memory_space<vmem>>, %arg6: memref<1x96xf32, #tpu.memory_space<vmem>>, %arg7: memref<1x8x32xbf16, #tpu.memory_space<vmem>>, %arg8: memref<1x8x32xbf16, #tpu.memory_space<vmem>>, %arg9: memref<1x8x32xbf16, #tpu.memory_space<vmem>>) attributes {dimension_semantics = [#tpu.dimension_semantics<parallel>, #tpu.dimension_semantics<parallel>], iteration_bounds = array<i64: 2, 1>, scalar_prefetch = 0 : i64, scratch_operands = 0 : i64, tpu.core_type = #tpu.core_type<tc>, window_params = [{transform_indices = @transform_0, window_bounds = array<i64: 1, 8, 32>}, {pipeline_mode = #tpu.pipeline_mode<synchronous>, transform_indices = @transform_1, window_bounds = array<i64: 1, 32>}, {pipeline_mode = #tpu.pipeline_mode<synchronous>, transform_indices = @transform_2, window_bounds = array<i64: 1, 32>}, {pipeline_mode = #tpu.pipeline_mode<synchronous>, transform_indices = @transform_3, window_bounds = array<i64: 32, 96>}, {pipeline_mode = #tpu.pipeline_mode<synchronous>, transform_indices = @transform_4, window_bounds = array<i64: 1, 96>}, {transform_indices = @transform_5, window_bounds = array<i64: 1, 8, 32>}, {transform_indices = @transform_6, window_bounds = array<i64: 1, 8, 32>}, {transform_indices = @transform_7, window_bounds = array<i64: 1, 8, 32>}]} {
    %c0 = arith.constant 0 : index
    %c0_0 = arith.constant 0 : index
    %c0_1 = arith.constant 0 : index
    %0 = vector.load %arg2[%c0, %c0_0, %c0_1] : memref<1x8x32xf32, #tpu.memory_space<vmem>>, vector<1x8x32xf32>
    %1 = vector.shape_cast %0 : vector<1x8x32xf32> to vector<8x32xf32>
    %c0_2 = arith.constant 0 : index
    %c0_3 = arith.constant 0 : index
    %2 = vector.load %arg3[%c0_2, %c0_3] : memref<1x32xf32, #tpu.memory_space<vmem>>, vector<1x32xf32>
    %c0_4 = arith.constant 0 : index
    %c0_5 = arith.constant 0 : index
    %3 = vector.load %arg4[%c0_4, %c0_5] : memref<1x32xf32, #tpu.memory_space<vmem>>, vector<1x32xf32>
    %cst = arith.constant dense<0.000000e+00> : vector<8xf32>
    %4 = vector.multi_reduction <add>, %1, %cst [1] : vector<8x32xf32> to vector<8xf32>
    %5 = vector.shape_cast %4 : vector<8xf32> to vector<8x1xf32>
    %cst_6 = arith.constant 3.200000e+01 : f32
    %6 = vector.broadcast %cst_6 : f32 to vector<8x1xf32>
    %7 = arith.divf %5, %6 : vector<8x1xf32>
    %8 = vector.broadcast %7 : vector<8x1xf32> to vector<8x32xf32>
    %9 = arith.subf %1, %8 : vector<8x32xf32>
    %10 = vector.broadcast %7 : vector<8x1xf32> to vector<8x32xf32>
    %11 = arith.subf %1, %10 : vector<8x32xf32>
    %12 = arith.mulf %9, %11 : vector<8x32xf32>
    %cst_7 = arith.constant dense<0.000000e+00> : vector<8xf32>
    %13 = vector.multi_reduction <add>, %12, %cst_7 [1] : vector<8x32xf32> to vector<8xf32>
    %14 = vector.shape_cast %13 : vector<8xf32> to vector<8x1xf32>
    %cst_8 = arith.constant 3.200000e+01 : f32
    %15 = vector.broadcast %cst_8 : f32 to vector<8x1xf32>
    %16 = arith.divf %14, %15 : vector<8x1xf32>
    %17 = vector.broadcast %7 : vector<8x1xf32> to vector<8x32xf32>
    %18 = arith.subf %1, %17 : vector<8x32xf32>
    %cst_9 = arith.constant 9.99999974E-6 : f32
    %19 = vector.broadcast %cst_9 : f32 to vector<8x1xf32>
    %20 = arith.addf %16, %19 : vector<8x1xf32>
    %21 = math.rsqrt %20 : vector<8x1xf32>
    %22 = vector.broadcast %21 : vector<8x1xf32> to vector<8x32xf32>
    %23 = arith.mulf %18, %22 : vector<8x32xf32>
    %24 = vector.broadcast %2 : vector<1x32xf32> to vector<8x32xf32>
    %25 = arith.mulf %23, %24 : vector<8x32xf32>
    %26 = vector.broadcast %3 : vector<1x32xf32> to vector<8x32xf32>
    %27 = arith.addf %25, %26 : vector<8x32xf32>
    %28 = arith.truncf %27 : vector<8x32xf32> to vector<8x32xbf16>
    %c0_10 = arith.constant 0 : index
    %c0_11 = arith.constant 0 : index
    %29 = vector.load %arg5[%c0_10, %c0_11] : memref<32x96xbf16, #tpu.memory_space<vmem>>, vector<32x96xbf16>
    %cst_12 = arith.constant dense<0.000000e+00> : vector<8x96xf32>
    %30 = tpu.matmul %28, %29, %cst_12 {dimension_numbers = #tpu.dot_dimension_numbers<[1], [0], [0], [1], [0, 0, 1, 1], [], []>} : vector<8x32xbf16>, vector<32x96xbf16>, vector<8x96xf32> -> vector<8x96xf32>
    %c0_13 = arith.constant 0 : index
    %c0_14 = arith.constant 0 : index
    %31 = vector.load %arg6[%c0_13, %c0_14] : memref<1x96xf32, #tpu.memory_space<vmem>>, vector<1x96xf32>
    %32 = vector.broadcast %31 : vector<1x96xf32> to vector<8x96xf32>
    %33 = arith.addf %30, %32 : vector<8x96xf32>
    %34 = arith.truncf %33 : vector<8x96xf32> to vector<8x96xbf16>
    %35 = vector.extract_strided_slice %34 {offsets = [0, 0], sizes = [8, 32], strides = [1, 1]} : vector<8x96xbf16> to vector<8x32xbf16>
    %c0_15 = arith.constant 0 : index
    %c0_16 = arith.constant 0 : index
    %c0_17 = arith.constant 0 : index
    %36 = vector.load %arg7[%c0_15, %c0_16, %c0_17] : memref<1x8x32xbf16, #tpu.memory_space<vmem>>, vector<1x8x32xbf16>
    %37 = vector.shape_cast %36 : vector<1x8x32xbf16> to vector<8x32xbf16>
    %38 = vector.shape_cast %35 : vector<8x32xbf16> to vector<1x8x32xbf16>
    tpu.vector_store %arg7[%c0_15, %c0_16, %c0_17], %38 {strides = array<i32>} : memref<1x8x32xbf16, #tpu.memory_space<vmem>>, vector<1x8x32xbf16>,
    %39 = vector.extract_strided_slice %34 {offsets = [0, 32], sizes = [8, 32], strides = [1, 1]} : vector<8x96xbf16> to vector<8x32xbf16>
    %c0_18 = arith.constant 0 : index
    %c0_19 = arith.constant 0 : index
    %c0_20 = arith.constant 0 : index
    %40 = vector.load %arg8[%c0_18, %c0_19, %c0_20] : memref<1x8x32xbf16, #tpu.memory_space<vmem>>, vector<1x8x32xbf16>
    %41 = vector.shape_cast %40 : vector<1x8x32xbf16> to vector<8x32xbf16>
    %42 = vector.shape_cast %39 : vector<8x32xbf16> to vector<1x8x32xbf16>
    tpu.vector_store %arg8[%c0_18, %c0_19, %c0_20], %42 {strides = array<i32>} : memref<1x8x32xbf16, #tpu.memory_space<vmem>>, vector<1x8x32xbf16>,
    %43 = vector.extract_strided_slice %34 {offsets = [0, 64], sizes = [8, 32], strides = [1, 1]} : vector<8x96xbf16> to vector<8x32xbf16>
    %c0_21 = arith.constant 0 : index
    %c0_22 = arith.constant 0 : index
    %c0_23 = arith.constant 0 : index
    %44 = vector.load %arg9[%c0_21, %c0_22, %c0_23] : memref<1x8x32xbf16, #tpu.memory_space<vmem>>, vector<1x8x32xbf16>
    %45 = vector.shape_cast %44 : vector<1x8x32xbf16> to vector<8x32xbf16>
    %46 = vector.shape_cast %43 : vector<8x32xbf16> to vector<1x8x32xbf16>
    tpu.vector_store %arg9[%c0_21, %c0_22, %c0_23], %46 {strides = array<i32>} : memref<1x8x32xbf16, #tpu.memory_space<vmem>>, vector<1x8x32xbf16>,
    return
  }
  func.func @transform_0(%arg0: i32, %arg1: i32) -> (i32, i32, i32) {
    %c0_i32 = arith.constant 0 : i32
    %c0_i32_0 = arith.constant 0 : i32
    return %arg0, %arg1, %c0_i32 : i32, i32, i32
  }
  func.func @transform_1(%arg0: i32, %arg1: i32) -> (i32, i32) {
    %c0_i32 = arith.constant 0 : i32
    %c0_i32_0 = arith.constant 0 : i32
    %c0_i32_1 = arith.constant 0 : i32
    return %c0_i32, %c0_i32_0 : i32, i32
  }
  func.func @transform_2(%arg0: i32, %arg1: i32) -> (i32, i32) {
    %c0_i32 = arith.constant 0 : i32
    %c0_i32_0 = arith.constant 0 : i32
    %c0_i32_1 = arith.constant 0 : i32
    return %c0_i32, %c0_i32_0 : i32, i32
  }
  func.func @transform_3(%arg0: i32, %arg1: i32) -> (i32, i32) {
    %c0_i32 = arith.constant 0 : i32
    %c0_i32_0 = arith.constant 0 : i32
    %c0_i32_1 = arith.constant 0 : i32
    return %c0_i32, %c0_i32_0 : i32, i32
  }
  func.func @transform_4(%arg0: i32, %arg1: i32) -> (i32, i32) {
    %c0_i32 = arith.constant 0 : i32
    %c0_i32_0 = arith.constant 0 : i32
    %c0_i32_1 = arith.constant 0 : i32
    return %c0_i32, %c0_i32_0 : i32, i32
  }
  func.func @transform_5(%arg0: i32, %arg1: i32) -> (i32, i32, i32) {
    %c0_i32 = arith.constant 0 : i32
    %c0_i32_0 = arith.constant 0 : i32
    return %arg0, %arg1, %c0_i32 : i32, i32, i32
  }
  func.func @transform_6(%arg0: i32, %arg1: i32) -> (i32, i32, i32) {
    %c0_i32 = arith.constant 0 : i32
    %c0_i32_0 = arith.constant 0 : i32
    return %arg0, %arg1, %c0_i32 : i32, i32, i32
  }
  func.func @transform_7(%arg0: i32, %arg1: i32) -> (i32, i32, i32) {
    %c0_i32 = arith.constant 0 : i32
    %c0_i32_0 = arith.constant 0 : i32
    return %arg0, %arg1, %c0_i32 : i32, i32, i32
  }
}

</mosaic_0001>

<llo_original>
// kernel: tpu_custom_call.1
$region0: #{tpu_custom_call.1}
  #allocation0 [shape = 'u32[]', space=smem, size = 0x4, offset = 0x4, fixed_abs, tag = 'smem constant byte address 0x4 - core index']
  #allocation1 [shape = 'u32[144,128]{1,0:T(1,128)}', space=vmem, size = 0x12000, scoped, tag = 'internal scratch']
  %s0 = inlined_call_operand.hbm [shape: f32[2,8,32], index: 0, kind: input, shape index: {}]
  %s1 = inlined_call_operand.vmem [shape: f32[1,32], index: 1, kind: input, shape index: {}]
  %s2 = inlined_call_operand.vmem [shape: f32[1,32], index: 2, kind: input, shape index: {}]
  %s3 = inlined_call_operand.hbm [shape: bf16[32,96], index: 3, kind: input, shape index: {}]
  %s4 = inlined_call_operand.vmem [shape: f32[1,96], index: 4, kind: input, shape index: {}]
  %s5 = inlined_call_operand.hbm [shape: bf16[2,8,32], index: 5, kind: output, shape index: {0}]
  %s6 = inlined_call_operand.hbm [shape: bf16[2,8,32], index: 6, kind: output, shape index: {1}]
  %s7 = inlined_call_operand.hbm [shape: bf16[2,8,32], index: 7, kind: output, shape index: {2}]
  %8 = xla_tuple %s5, %s6, %s7
  %s9 = sld [smem:[#allocation0]]
  $region77: #{tpu_custom_call.1} parent=0
    _
  %s11 = ssub.s32 1, %s9
  %s12 = scalar_select 0, %s11, %s9
  $region1: #{tpu_custom_call.1} parent=0
    #allocation2 [shape = 'u8[8192]{0}', space=vmem, size = 0x2000, scoped, tag = 'input window, operand 0']
    #allocation3 [shape = 's32[2]{0}', space=sflag, size = 0x8, scoped, tag = 'scoped memory for tpu_custom_call.1']
    #allocation4 [shape = 's32[2]{0}', space=sflag, size = 0x8, scoped, tag = 'scoped memory for tpu_custom_call.1']
    #allocation5 [shape = 'u8[8192]{0}', space=vmem, size = 0x2000, scoped, tag = 'input window, operand 3, single buffered']
    #allocation6 [shape = 's32[1]{0}', space=sflag, size = 0x4, scoped, tag = 'scoped memory for tpu_custom_call.1']
    #allocation7 [shape = 'u8[4096]{0}', space=vmem, size = 0x1000, scoped, tag = 'output window, operand 0']
    #allocation8 [shape = 'u8[4096]{0}', space=vmem, size = 0x1000, scoped, tag = 'output window, operand 1']
    #allocation9 [shape = 's32[2]{0}', space=sflag, size = 0x8, scoped, tag = 'scoped memory for tpu_custom_call.1']
    #allocation10 [shape = 'u8[4096]{0}', space=vmem, size = 0x1000, scoped, tag = 'output window, operand 2']
    %13 = vsyncpa [#allocation3], 0
    %s14 = scalar_lea.sflag [#allocation3], 1
    %15 = vsyncpa %s14, 0
    %16 = vsyncpa [#allocation6], 0
    %17 = vsyncpa [#allocation4], 0
    %s18 = scalar_lea.sflag [#allocation4], 1
    %19 = vsyncpa %s18, 0
    %20 = vsyncpa [#allocation9], 0
    %s21 = scalar_lea.sflag [#allocation9], 1
    %22 = vsyncpa %s21, 0
    loop: start=0, step=1, limit=4
    $region2: #{tpu_custom_call.1} parent=1 // loop_pre_header
      _
    $region3: #{tpu_custom_call.1} parent=1 // loop_header
      %s24 = sphi 0, %s28
      %p25 = scmp.ge.s32.totalorder %s24, 4
      %s31 = sphi 0, %s43
      %s32 = sphi 0, %s39
      %s33 = sphi 0, %s31
      %s34 = sphi 0, %s32
      %s35 = sphi 0, %s33
      %s36 = sphi 0, %s34
      %s48 = sphi 0, %s50
      %s51 = sphi 0, %s48
      %s52 = sphi 0, %s51
      %s68 = sphi 0, %s52
      %s72 = sphi 0, %s72
      %s74 = sphi 0, %s72
      %s75 = sphi 0, %s74
      %s89 = sphi 0, %s75
      %s93 = sphi 0, %s93
      %s95 = sphi 0, %s93
      %s96 = sphi 0, %s95
      %s110 = sphi 0, %s96
      %s114 = sphi 0, %s114
      %s116 = sphi 0, %s114
      %s117 = sphi 0, %s116
      %s131 = sphi 0, %s117
      %s135 = sphi 0, %s135
      %s137 = sphi 0, %s135
      %s138 = sphi 0, %s137
      %s152 = sphi 0, %s138
      %s160 = sphi 0, %s162
      %s163 = sphi 0, %s160
      %s164 = sphi 0, %s163
      %s180 = sphi 0, %s164
      %s188 = sphi 0, %s190
      %s191 = sphi 0, %s188
      %s192 = sphi 0, %s191
      %s208 = sphi 0, %s192
      %s216 = sphi 0, %s218
      %s219 = sphi 0, %s216
      %s220 = sphi 0, %s219
      %s236 = sphi 0, %s220
    $region4: #{tpu_custom_call.1} parent=1 // loop_header_branch
      %27 = sbr.rel (%p25) target = $region8
    $region5: #{tpu_custom_call.1} parent=1 // loop_body
      %s29 = ssub.s32 %s24, 1
      %s30 = ssub.s32 %s24, 2
      %s37 = sadd.s32 1, %s32
      %p38 = scmp.ge.s32.totalorder %s37, 1
      %s39 = scalar_select %p38, 0, %s37
      %s40 = sadd.s32 1, %s31
      %s41 = scalar_select %p38, %s40, %s31
      %p42 = scmp.ge.s32.totalorder %s41, 2
      %s43 = scalar_select %p42, 0, %s41
      %s44 = ssub.s32 %s31, %s43
      %s45 = ssub.s32 %s32, %s39
      %s46 = sor.u32 %s44, %s45
      %p47 = scmp.eq.s32.totalorder %s46, 0
      %s49 = sadd.s32 %s48, 1
      %s50 = scalar_select %p47, %s48, %s49
      %p53 = pneg %p47
      %p54 = scmp.eq.s32.totalorder %s24, 1
      %p55 = por %p53, %p54
      %p56 = scmp.ne.s32.totalorder %s48, %s51
      %p57 = scmp.eq.s32.totalorder %s24, 0
      %p58 = por %p56, %p57
      %p59 = scmp.ne.s32.totalorder %s48, %s51
      %p60 = scmp.eq.s32.totalorder %s29, 1
      %p61 = por %p59, %p60
      %p62 = scmp.ne.s32.totalorder %s51, %s52
      %p63 = scmp.eq.s32.totalorder %s29, 0
      %p64 = por %p62, %p63
      %p65 = scmp.ne.s32.totalorder %s51, %s52
      %p66 = scmp.eq.s32.totalorder %s30, 1
      %p67 = por %p65, %p66
      %p69 = scmp.ne.s32.totalorder %s52, %s68
      %p70 = scmp.eq.s32.totalorder %s30, 0
      %p71 = por %p69, %p70
      %s73 = sadd.s32 %s72, 1
      %p76 = scmp.eq.s32.totalorder %s24, 1
      %p77 = scmp.ne.s32.totalorder %s72, %s74
      %p78 = scmp.eq.s32.totalorder %s24, 0
      %p79 = por %p77, %p78
      %p80 = scmp.ne.s32.totalorder %s72, %s74
      %p81 = scmp.eq.s32.totalorder %s29, 1
      %p82 = por %p80, %p81
      %p83 = scmp.ne.s32.totalorder %s74, %s75
      %p84 = scmp.eq.s32.totalorder %s29, 0
      %p85 = por %p83, %p84
      %p86 = scmp.ne.s32.totalorder %s74, %s75
      %p87 = scmp.eq.s32.totalorder %s30, 1
      %p88 = por %p86, %p87
      %p90 = scmp.ne.s32.totalorder %s75, %s89
      %p91 = scmp.eq.s32.totalorder %s30, 0
      %p92 = por %p90, %p91
      %s94 = sadd.s32 %s93, 1
      %p97 = scmp.eq.s32.totalorder %s24, 1
      %p98 = scmp.ne.s32.totalorder %s93, %s95
      %p99 = scmp.eq.s32.totalorder %s24, 0
      %p100 = por %p98, %p99
      %p101 = scmp.ne.s32.totalorder %s93, %s95
      %p102 = scmp.eq.s32.totalorder %s29, 1
      %p103 = por %p101, %p102
      %p104 = scmp.ne.s32.totalorder %s95, %s96
      %p105 = scmp.eq.s32.totalorder %s29, 0
      %p106 = por %p104, %p105
      %p107 = scmp.ne.s32.totalorder %s95, %s96
      %p108 = scmp.eq.s32.totalorder %s30, 1
      %p109 = por %p107, %p108
      %p111 = scmp.ne.s32.totalorder %s96, %s110
      %p112 = scmp.eq.s32.totalorder %s30, 0
      %p113 = por %p111, %p112
      %s115 = sadd.s32 %s114, 1
      %p118 = scmp.eq.s32.totalorder %s24, 1
      %p119 = scmp.ne.s32.totalorder %s114, %s116
      %p120 = scmp.eq.s32.totalorder %s24, 0
      %p121 = por %p119, %p120
      %p122 = scmp.ne.s32.totalorder %s114, %s116
      %p123 = scmp.eq.s32.totalorder %s29, 1
      %p124 = por %p122, %p123
      %p125 = scmp.ne.s32.totalorder %s116, %s117
      %p126 = scmp.eq.s32.totalorder %s29, 0
      %p127 = por %p125, %p126
      %p128 = scmp.ne.s32.totalorder %s116, %s117
      %p129 = scmp.eq.s32.totalorder %s30, 1
      %p130 = por %p128, %p129
      %p132 = scmp.ne.s32.totalorder %s117, %s131
      %p133 = scmp.eq.s32.totalorder %s30, 0
      %p134 = por %p132, %p133
      %s136 = sadd.s32 %s135, 1
      %p139 = scmp.eq.s32.totalorder %s24, 1
      %p140 = scmp.ne.s32.totalorder %s135, %s137
      %p141 = scmp.eq.s32.totalorder %s24, 0
      %p142 = por %p140, %p141
      %p143 = scmp.ne.s32.totalorder %s135, %s137
      %p144 = scmp.eq.s32.totalorder %s29, 1
      %p145 = por %p143, %p144
      %p146 = scmp.ne.s32.totalorder %s137, %s138
      %p147 = scmp.eq.s32.totalorder %s29, 0
      %p148 = por %p146, %p147
      %p149 = scmp.ne.s32.totalorder %s137, %s138
      %p150 = scmp.eq.s32.totalorder %s30, 1
      %p151 = por %p149, %p150
      %p153 = scmp.ne.s32.totalorder %s138, %s152
      %p154 = scmp.eq.s32.totalorder %s30, 0
      %p155 = por %p153, %p154
      %s156 = ssub.s32 %s31, %s43
      %s157 = ssub.s32 %s32, %s39
      %s158 = sor.u32 %s156, %s157
      %p159 = scmp.eq.s32.totalorder %s158, 0
      %s161 = sadd.s32 %s160, 1
      %s162 = scalar_select %p159, %s160, %s161
      %p165 = pneg %p159
      %p166 = scmp.eq.s32.totalorder %s24, 1
      %p167 = por %p165, %p166
      %p168 = scmp.ne.s32.totalorder %s160, %s163
      %p169 = scmp.eq.s32.totalorder %s24, 0
      %p170 = por %p168, %p169
      %p171 = scmp.ne.s32.totalorder %s160, %s163
      %p172 = scmp.eq.s32.totalorder %s29, 1
      %p173 = por %p171, %p172
      %p174 = scmp.ne.s32.totalorder %s163, %s164
      %p175 = scmp.eq.s32.totalorder %s29, 0
      %p176 = por %p174, %p175
      %p177 = scmp.ne.s32.totalorder %s163, %s164
      %p178 = scmp.eq.s32.totalorder %s30, 1
      %p179 = por %p177, %p178
      %p181 = scmp.ne.s32.totalorder %s164, %s180
      %p182 = scmp.eq.s32.totalorder %s30, 0
      %p183 = por %p181, %p182
      %s184 = ssub.s32 %s31, %s43
      %s185 = ssub.s32 %s32, %s39
      %s186 = sor.u32 %s184, %s185
      %p187 = scmp.eq.s32.totalorder %s186, 0
      %s189 = sadd.s32 %s188, 1
      %s190 = scalar_select %p187, %s188, %s189
      %p193 = pneg %p187
      %p194 = scmp.eq.s32.totalorder %s24, 1
      %p195 = por %p193, %p194
      %p196 = scmp.ne.s32.totalorder %s188, %s191
      %p197 = scmp.eq.s32.totalorder %s24, 0
      %p198 = por %p196, %p197
      %p199 = scmp.ne.s32.totalorder %s188, %s191
      %p200 = scmp.eq.s32.totalorder %s29, 1
      %p201 = por %p199, %p200
      %p202 = scmp.ne.s32.totalorder %s191, %s192
      %p203 = scmp.eq.s32.totalorder %s29, 0
      %p204 = por %p202, %p203
      %p205 = scmp.ne.s32.totalorder %s191, %s192
      %p206 = scmp.eq.s32.totalorder %s30, 1
      %p207 = por %p205, %p206
      %p209 = scmp.ne.s32.totalorder %s192, %s208
      %p210 = scmp.eq.s32.totalorder %s30, 0
      %p211 = por %p209, %p210
      %s212 = ssub.s32 %s31, %s43
      %s213 = ssub.s32 %s32, %s39
      %s214 = sor.u32 %s212, %s213
      %p215 = scmp.eq.s32.totalorder %s214, 0
      %s217 = sadd.s32 %s216, 1
      %s218 = scalar_select %p215, %s216, %s217
      %p221 = pneg %p215
      %p222 = scmp.eq.s32.totalorder %s24, 1
      %p223 = por %p221, %p222
      %p224 = scmp.ne.s32.totalorder %s216, %s219
      %p225 = scmp.eq.s32.totalorder %s24, 0
      %p226 = por %p224, %p225
      %p227 = scmp.ne.s32.totalorder %s216, %s219
      %p228 = scmp.eq.s32.totalorder %s29, 1
      %p229 = por %p227, %p228
      %p230 = scmp.ne.s32.totalorder %s219, %s220
      %p231 = scmp.eq.s32.totalorder %s29, 0
      %p232 = por %p230, %p231
      %p233 = scmp.ne.s32.totalorder %s219, %s220
      %p234 = scmp.eq.s32.totalorder %s30, 1
      %p235 = por %p233, %p234
      %p237 = scmp.ne.s32.totalorder %s220, %s236
      %p238 = scmp.eq.s32.totalorder %s30, 0
      %p239 = por %p237, %p238
      %p240 = scmp.le.s32.totalorder 1, %s24
      %p241 = scmp.lt.s32.totalorder %s24, 3
      %p242 = pnand %p240, %p241
      %p243 = pneg %p242
      // Predicated region
      $region9: #{tpu_custom_call.1} parent=5 // pred_check
        _
      $region10: #{tpu_custom_call.1} parent=5 // pred_check_branch
        %245 = sbr.rel (%p242) target = $region12
      $region11: #{tpu_custom_call.1} parent=5 // pred_region
        %s246 = ssub.s32 %s24, 1
        // Predicated region
        $region13: #{tpu_custom_call.1} parent=11 // pred_check
          %p247 = pneg %p85
        $region14: #{tpu_custom_call.1} parent=11 // pred_check_branch
          %249 = sbr.rel (%p247) target = $region16
        $region15: #{tpu_custom_call.1} parent=11 // pred_region
          _
        $region16: #{tpu_custom_call.1} parent=11 // pred_fallthru
          _
        // Predicated region
        $region17: #{tpu_custom_call.1} parent=11 // pred_check
          %p250 = pneg %p106
        $region18: #{tpu_custom_call.1} parent=11 // pred_check_branch
          %252 = sbr.rel (%p250) target = $region20
        $region19: #{tpu_custom_call.1} parent=11 // pred_region
          _
        $region20: #{tpu_custom_call.1} parent=11 // pred_fallthru
          _
        // Predicated region
        $region21: #{tpu_custom_call.1} parent=11 // pred_check
          %p253 = pneg %p127
        $region22: #{tpu_custom_call.1} parent=11 // pred_check_branch
          %255 = sbr.rel (%p253) target = $region24
        $region23: #{tpu_custom_call.1} parent=11 // pred_region
          %s257 = ssub.s32 256, 256
          %258 = vsyncadd [#allocation6], %s257
          %s259 = sshll.u32 [#allocation5], 4
          %s260 = int_to_ptr.vmem [resolvable:$true] %s259
          %265 = dma.hbm_to_vmem [thread:$0]  %s3, 256, %s260, [#allocation6], 64, 64, 4
        $region24: #{tpu_custom_call.1} parent=11 // pred_fallthru
          _
        // Predicated region
        $region25: #{tpu_custom_call.1} parent=11 // pred_check
          %p266 = pneg %p148
        $region26: #{tpu_custom_call.1} parent=11 // pred_check_branch
          %268 = sbr.rel (%p266) target = $region28
        $region27: #{tpu_custom_call.1} parent=11 // pred_region
          _
        $region28: #{tpu_custom_call.1} parent=11 // pred_fallthru
          _
      $region12: #{tpu_custom_call.1} parent=5 // pred_fallthru
        _
      %p269 = scmp.lt.s32.totalorder %s24, 2
      // Predicated region
      $region29: #{tpu_custom_call.1} parent=5 // pred_check
        %p270 = pneg %p269
      $region30: #{tpu_custom_call.1} parent=5 // pred_check_branch
        %272 = sbr.rel (%p270) target = $region32
      $region31: #{tpu_custom_call.1} parent=5 // pred_region
        // Predicated region
        $region33: #{tpu_custom_call.1} parent=31 // pred_check
          %p273 = pneg %p58
        $region34: #{tpu_custom_call.1} parent=31 // pred_check_branch
          %275 = sbr.rel (%p273) target = $region36
        $region35: #{tpu_custom_call.1} parent=31 // pred_region
          %s276 = sand.u32 %s48, 1
          %s277 = scalar_lea.sflag [#allocation3], %s276
          %s278 = sand.u32 %s48, 1
          %s279 = smul.addr %s278, 8
          %s280 = scalar_lea.vmem [#allocation2], %s279
          %s282 = ssub.s32 128, 128
          %283 = vsyncadd %s277, %s282
          %s284 = sadd.s32 %s32, %s31
          %s285 = smul.addr %s284, 128
          %s286 = scalar_lea.hbm %s0, %s285
          %s288 = sshll.u32 %s280, 4
          %s289 = int_to_ptr.vmem [resolvable:$true] %s288
          %291 = dma.hbm_to_vmem [thread:$0]  %s286, 128, %s289, %s277
        $region36: #{tpu_custom_call.1} parent=31 // pred_fallthru
          _
      $region32: #{tpu_custom_call.1} parent=5 // pred_fallthru
        _
      %p292 = scmp.le.s32.totalorder 1, %s24
      %p293 = scmp.lt.s32.totalorder %s24, 3
      %p294 = pnand %p292, %p293
      %p295 = pneg %p294
      // Predicated region
      $region37: #{tpu_custom_call.1} parent=5 // pred_check
        _
      $region38: #{tpu_custom_call.1} parent=5 // pred_check_branch
        %297 = sbr.rel (%p294) target = $region40
      $region39: #{tpu_custom_call.1} parent=5 // pred_region
        %s298 = ssub.s32 %s24, 1
        %s299 = sand.u32 %s51, 1
        %s300 = scalar_lea.sflag [#allocation3], %s299
        %s301 = sand.u32 %s51, 1
        %s302 = smul.addr %s301, 8
        %s303 = scalar_lea.vmem [#allocation2], %s302
        // Predicated region
        $region41: #{tpu_custom_call.1} parent=39 // pred_check
          %p304 = pneg %p64
        $region42: #{tpu_custom_call.1} parent=39 // pred_check_branch
          %306 = sbr.rel (%p304) target = $region44
        $region43: #{tpu_custom_call.1} parent=39 // pred_region
          %307 = dma.done %s300, 128
        $region44: #{tpu_custom_call.1} parent=39 // pred_fallthru
          _
        // Predicated region
        $region45: #{tpu_custom_call.1} parent=39 // pred_check
          %p308 = pneg %p127
        $region46: #{tpu_custom_call.1} parent=39 // pred_check_branch
          %310 = sbr.rel (%p308) target = $region48
        $region47: #{tpu_custom_call.1} parent=39 // pred_region
          %311 = dma.done [#allocation6], 256
        $region48: #{tpu_custom_call.1} parent=39 // pred_fallthru
          _
        %s312 = sand.u32 %s51, 1
        %s313 = scalar_lea.sflag [#allocation3], %s312
        %s314 = sand.u32 %s51, 1
        %s315 = smul.addr %s314, 8
        %s316 = scalar_lea.vmem [#allocation2], %s315
        %p317 = pneg %p64
        %p318 = pneg %p61
        %p319 = pneg %p85
        %p320 = pneg %p82
        %p321 = pneg %p106
        %p322 = pneg %p103
        %p323 = pneg %p127
        %p324 = pneg %p124
        %p325 = pneg %p148
        %p326 = pneg %p145
        %p327 = pneg %p176
        %p328 = pneg %p173
        %s329 = sand.u32 %s163, 1
        %s330 = scalar_lea.sflag [#allocation4], %s329
        %s331 = sand.u32 %s163, 1
        %s332 = smul.addr %s331, 4
        %s333 = scalar_lea.vmem [#allocation7], %s332
        %p334 = pneg %p204
        %p335 = pneg %p201
        %s336 = sand.u32 %s29, 1
        %s337 = scalar_lea.sflag [#allocation9], %s336
        %s338 = sand.u32 %s191, 1
        %s339 = smul.addr %s338, 4
        %s340 = scalar_lea.vmem [#allocation8], %s339
        %p341 = pneg %p232
        %p342 = pneg %p229
        %s343 = sand.u32 %s29, 1
        %s344 = scalar_lea.sflag [#allocation9], %s343
        %s345 = sand.u32 %s219, 1
        %s346 = smul.addr %s345, 4
        %s347 = scalar_lea.vmem [#allocation10], %s346
        %v349 = vld [vmem:[%s303] sm:$0xff]
        %v350 = vld [vmem:[%s1] sm:$0x1]
        %v351 = vld [vmem:[%s2] sm:$0x1]
        %vm352 = vcmask 261120
        %v353 = vsel %vm352, %v349, 0.0
        %354 = vadd.xlane.f32.xlu0 %v353
        %v355 = vpop.xlane.xlu0 %354
        %v356 = vrcp.pop 32.0
        %v357 = vmul.f32 %v355, %v356
        %v358 = vsub.f32 %v349, %v357
        %v359 = vmul.f32 %v358, %v358
        %v360 = vsel %vm352, %v359, 0.0
        %361 = vadd.xlane.f32.xlu0 %v360
        %v362 = vpop.xlane.xlu0 %361
        %v363 = vmul.f32 %v362, %v356
        %v364 = vadd.f32 %v363, 1e-05
        %v365 = vrsqrt.pop %v364
        %v366 = vmul.f32 %v358, %v365
        %v368 = vlaneseq
        %v369 = vshrl.u32 %v368, 7
        %v370 = vsub.s32 0, %v369
        %v371 = vrot.slane %v350, %v370
        %v373 = vmul.f32 %v366, %v371
        %v375 = vlaneseq
        %v376 = vshrl.u32 %v375, 7
        %v377 = vsub.s32 0, %v376
        %v378 = vrot.slane %v351, %v377
        %v380 = vadd.f32 %v373, %v378
        %v381 = vpack.c.bf16 %v380, %v380
        %v382 = vld [vmem:[#allocation5] sm:$0xf]
        %v383 = vld [vmem:[#allocation5 + $0x4] sm:$0xf]
        %v384 = vld [vmem:[#allocation5 + $0x8] sm:$0xf]
        %v385 = vld [vmem:[#allocation5 + $0xc] sm:$0xf]
        %v386 = vld [vmem:[%s4] sm:$0x1]
        %v388 = vlaneseq
        %v389 = vshrl.u32 %v388, 7
        %v390 = vsub.s32 0, %v389
        %v391 = vrot.slane %v386, %v390
        %v397 = vunpack.c.l.b16 %v382
        %v398 = vunpack.c.l.b16 %v383
        %v399 = vunpack.c.l.b16 %v384
        %v400 = vunpack.c.l.b16 %v385
        %v401 = vpack.c.b16 %v398, %v397
        %v402 = vpack.c.b16 %v400, %v399
        %v406 = vsel %vm352, %v381, 0
        %408 = vmatprep.subr.bf16.mxu0 0
        %409 = vmatpush1.bf16.msra.mxu0 %v401
        %410 = vmatprep.subr.bf16.mxu0 0
        %411 = vmatpush1.bf16.msra.mxu0 %v402
        %412 = vmatprep.subr.bf16.mxu0 0
        %413 = vmatpush1.bf16.msra.mxu0 0
        %414 = vmatprep.subr.bf16.mxu0 0
        %415 = vmatpush1.bf16.msra.mxu0 0
        %416 = vmatprep.subr.bf16.mxu0 0
        %417 = vmatpush1.bf16.msra.mxu0 0
        %418 = vmatprep.subr.bf16.mxu0 0
        %419 = vmatpush1.bf16.msra.mxu0 0
        %420 = vmatprep.subr.bf16.mxu0 0
        %421 = vmatpush1.bf16.msra.mxu0 0
        %422 = vmatprep.subr.bf16.mxu0 0
        %423 = vmatpush1.bf16.msra.mxu0 0
        %424 = vmatprep.subr.bf16.mxu0 0
        %425 = vmatpush1.bf16.msra.mxu0 0
        %426 = vmatprep.subr.bf16.mxu0 0
        %427 = vmatpush1.bf16.msra.mxu0 0
        %428 = vmatprep.subr.bf16.mxu0 0
        %429 = vmatpush1.bf16.msra.mxu0 0
        %430 = vmatprep.subr.bf16.mxu0 0
        %431 = vmatpush1.bf16.msra.mxu0 0
        %432 = vmatprep.subr.bf16.mxu0 0
        %433 = vmatpush1.bf16.msra.mxu0 0
        %434 = vmatprep.subr.bf16.mxu0 0
        %435 = vmatpush1.bf16.msra.mxu0 0
        %436 = vmatprep.subr.bf16.mxu0 0
        %437 = vmatpush1.bf16.msra.mxu0 0
        %438 = vmatprep.subr.bf16.mxu0 0
        %439 = vmatpush1.bf16.msra.mxu0 0
        %440 = vmatprep.mubr.bf16.mxu0 0
        %441 = vmatmul.mubr.bf16.gmra.mrb[0].mxu0 %v406
        %v442 = vpop.f32.mrb[0].mxu0
        %v443 = vadd.f32 %v391, %v442
        %v444 = vpop.f32.mrb[0].mxu0
        %v445 = vpop.f32.mrb[0].mxu0
        %v446 = vpop.f32.mrb[0].mxu0
        %447 = vdwg.mxu0
        %v448 = vpack.c.bf16 %v443, %v443
        %vm449 = vcmask 257024
        %450 = vst.msk [vmem:[%s333] sm:$0xf] %vm449, %v448
        %v452 = vunpack.c.l.b16 %v448
        %v453 = vpack.c.b16 %v452, %v452
        %454 = vrot.lane.b32.xlu0 %v453, 96
        %v455 = vpop.permute.xlu0 %454
        %457 = vst.msk [vmem:[%s340] sm:$0xf] %vm449, %v455
        %458 = vrot.lane.b32.xlu0 %v453, 64
        %v459 = vpop.permute.xlu0 %458
        %461 = vst.msk [vmem:[%s347] sm:$0xf] %vm449, %v459
        %s462 = sand.u32 %s163, 1
        %s463 = scalar_lea.sflag [#allocation4], %s462
        %s464 = sand.u32 %s163, 1
        %s465 = smul.addr %s464, 4
        %s466 = scalar_lea.vmem [#allocation7], %s465
        %s467 = sand.u32 %s29, 1
        %s468 = scalar_lea.sflag [#allocation9], %s467
        %s469 = sand.u32 %s191, 1
        %s470 = smul.addr %s469, 4
        %s471 = scalar_lea.vmem [#allocation8], %s470
        %s472 = sand.u32 %s29, 1
        %s473 = scalar_lea.sflag [#allocation9], %s472
        %s474 = sand.u32 %s219, 1
        %s475 = smul.addr %s474, 4
        %s476 = scalar_lea.vmem [#allocation10], %s475
        // Predicated region
        $region49: #{tpu_custom_call.1} parent=39 // pred_check
          %p477 = pneg %p173
        $region50: #{tpu_custom_call.1} parent=39 // pred_check_branch
          %479 = sbr.rel (%p477) target = $region52
        $region51: #{tpu_custom_call.1} parent=39 // pred_region
          %s481 = ssub.s32 64, 64
          %482 = vsyncadd %s463, %s481
          %s483 = sadd.s32 %s34, %s33
          %s484 = smul.addr %s483, 64
          %s485 = scalar_lea.hbm %s5, %s484
          %s487 = sshll.u32 %s466, 4
          %s488 = int_to_ptr.vmem [resolvable:$true] %s487
          %490 = dma.vmem_to_hbm [thread:$0]  %s488, 64, %s485, %s463
        $region52: #{tpu_custom_call.1} parent=39 // pred_fallthru
          _
        // Predicated region
        $region53: #{tpu_custom_call.1} parent=39 // pred_check
          %p491 = pneg %p201
        $region54: #{tpu_custom_call.1} parent=39 // pred_check_branch
          %493 = sbr.rel (%p491) target = $region56
        $region55: #{tpu_custom_call.1} parent=39 // pred_region
          %s495 = ssub.s32 64, 64
          %496 = vsyncadd %s468, %s495
          %s497 = sadd.s32 %s34, %s33
          %s498 = smul.addr %s497, 64
          %s499 = scalar_lea.hbm %s6, %s498
          %s501 = sshll.u32 %s471, 4
          %s502 = int_to_ptr.vmem [resolvable:$true] %s501
          %504 = dma.vmem_to_hbm [thread:$0]  %s502, 64, %s499, %s468
        $region56: #{tpu_custom_call.1} parent=39 // pred_fallthru
          _
        // Predicated region
        $region57: #{tpu_custom_call.1} parent=39 // pred_check
          %p505 = pneg %p229
        $region58: #{tpu_custom_call.1} parent=39 // pred_check_branch
          %507 = sbr.rel (%p505) target = $region60
        $region59: #{tpu_custom_call.1} parent=39 // pred_region
          %s509 = ssub.s32 64, 64
          %510 = vsyncadd %s473, %s509
          %s511 = sadd.s32 %s34, %s33
          %s512 = smul.addr %s511, 64
          %s513 = scalar_lea.hbm %s7, %s512
          %s515 = sshll.u32 %s476, 4
          %s516 = int_to_ptr.vmem [resolvable:$true] %s515
          %518 = dma.vmem_to_hbm [thread:$0]  %s516, 64, %s513, %s473
        $region60: #{tpu_custom_call.1} parent=39 // pred_fallthru
          _
      $region40: #{tpu_custom_call.1} parent=5 // pred_fallthru
        _
      %p519 = scmp.le.s32.totalorder 2, %s24
      // Predicated region
      $region61: #{tpu_custom_call.1} parent=5 // pred_check
        %p520 = pneg %p519
      $region62: #{tpu_custom_call.1} parent=5 // pred_check_branch
        %522 = sbr.rel (%p520) target = $region64
      $region63: #{tpu_custom_call.1} parent=5 // pred_region
        %s523 = ssub.s32 %s24, 2
        // Predicated region
        $region65: #{tpu_custom_call.1} parent=63 // pred_check
          %p524 = pneg %p179
        $region66: #{tpu_custom_call.1} parent=63 // pred_check_branch
          %526 = sbr.rel (%p524) target = $region68
        $region67: #{tpu_custom_call.1} parent=63 // pred_region
          %s527 = sand.u32 %s164, 1
          %s528 = scalar_lea.sflag [#allocation4], %s527
          %s529 = sand.u32 %s164, 1
          %s530 = smul.addr %s529, 4
          %s531 = scalar_lea.vmem [#allocation7], %s530
          %532 = dma.done %s528, 64
        $region68: #{tpu_custom_call.1} parent=63 // pred_fallthru
          _
        // Predicated region
        $region69: #{tpu_custom_call.1} parent=63 // pred_check
          %p533 = pneg %p207
        $region70: #{tpu_custom_call.1} parent=63 // pred_check_branch
          %535 = sbr.rel (%p533) target = $region72
        $region71: #{tpu_custom_call.1} parent=63 // pred_region
          %s536 = sand.u32 %s30, 1
          %s537 = scalar_lea.sflag [#allocation9], %s536
          %s538 = sand.u32 %s192, 1
          %s539 = smul.addr %s538, 4
          %s540 = scalar_lea.vmem [#allocation8], %s539
          %541 = dma.done %s537, 64
        $region72: #{tpu_custom_call.1} parent=63 // pred_fallthru
          _
        // Predicated region
        $region73: #{tpu_custom_call.1} parent=63 // pred_check
          %p542 = pneg %p235
        $region74: #{tpu_custom_call.1} parent=63 // pred_check_branch
          %544 = sbr.rel (%p542) target = $region76
        $region75: #{tpu_custom_call.1} parent=63 // pred_region
          %s545 = sand.u32 %s30, 1
          %s546 = scalar_lea.sflag [#allocation9], %s545
          %s547 = sand.u32 %s220, 1
          %s548 = smul.addr %s547, 4
          %s549 = scalar_lea.vmem [#allocation10], %s548
          %550 = dma.done %s546, 64
        $region76: #{tpu_custom_call.1} parent=63 // pred_fallthru
          _
      $region64: #{tpu_custom_call.1} parent=5 // pred_fallthru
        _
    $region6: #{tpu_custom_call.1} parent=1 // loop_footer
      %s28 = sadd.s32 1, %s24
    $region7: #{tpu_custom_call.1} parent=1 // loop_footer_branch
      %23 = sbr.rel target = $region3
    $region8: #{tpu_custom_call.1} parent=1 // loop_exit
      _
    %551 = vsyncpa [#allocation3], 1
    %s552 = scalar_lea.sflag [#allocation3], 1
    %553 = vsyncpa %s552, 1
    %554 = vsyncpa [#allocation6], 1
    %555 = vsyncpa [#allocation4], 1
    %s556 = scalar_lea.sflag [#allocation4], 1
    %557 = vsyncpa %s556, 1
    %558 = vsyncpa [#allocation9], 1
    %s559 = scalar_lea.sflag [#allocation9], 1
    %560 = vsyncpa %s559, 1

// kernel: tpu_custom_call.1
$region0: #{tpu_custom_call.1}
  #allocation0 [shape = 'u32[]', space=smem, size = 0x4, offset = 0x4, fixed_abs, tag = 'smem constant byte address 0x4 - core index']
  #allocation1 [shape = 'u32[144,128]{1,0:T(1,128)}', space=vmem, size = 0x12000, scoped, tag = 'internal scratch']
  %s0 = inlined_call_operand.hbm [shape: f32[2,8,32], index: 0, kind: input, shape index: {}]
  %s1 = inlined_call_operand.vmem [shape: f32[1,32], index: 1, kind: input, shape index: {}]
  %s2 = inlined_call_operand.vmem [shape: f32[1,32], index: 2, kind: input, shape index: {}]
  %s3 = inlined_call_operand.hbm [shape: bf16[32,96], index: 3, kind: input, shape index: {}]
  %s4 = inlined_call_operand.vmem [shape: f32[1,96], index: 4, kind: input, shape index: {}]
  %s5 = inlined_call_operand.hbm [shape: bf16[2,8,32], index: 5, kind: output, shape index: {0}]
  %s6 = inlined_call_operand.hbm [shape: bf16[2,8,32], index: 6, kind: output, shape index: {1}]
  %s7 = inlined_call_operand.hbm [shape: bf16[2,8,32], index: 7, kind: output, shape index: {2}]
  %8 = xla_tuple %s5, %s6, %s7
  %s9 = sld [smem:[#allocation0]]
  $region77: #{tpu_custom_call.1} parent=0
    _
  %s11 = ssub.s32 1, %s9
  %s12 = scalar_select 0, %s11, %s9
  $region1: #{tpu_custom_call.1} parent=0
    #allocation2 [shape = 'u8[8192]{0}', space=vmem, size = 0x2000, scoped, tag = 'input window, operand 0']
    #allocation3 [shape = 's32[2]{0}', space=sflag, size = 0x8, scoped, tag = 'scoped memory for tpu_custom_call.1']
    #allocation4 [shape = 's32[2]{0}', space=sflag, size = 0x8, scoped, tag = 'scoped memory for tpu_custom_call.1']
    #allocation5 [shape = 'u8[8192]{0}', space=vmem, size = 0x2000, scoped, tag = 'input window, operand 3, single buffered']
    #allocation6 [shape = 's32[1]{0}', space=sflag, size = 0x4, scoped, tag = 'scoped memory for tpu_custom_call.1']
    #allocation7 [shape = 'u8[4096]{0}', space=vmem, size = 0x1000, scoped, tag = 'output window, operand 0']
    #allocation8 [shape = 'u8[4096]{0}', space=vmem, size = 0x1000, scoped, tag = 'output window, operand 1']
    #allocation9 [shape = 's32[2]{0}', space=sflag, size = 0x8, scoped, tag = 'scoped memory for tpu_custom_call.1']
    #allocation10 [shape = 'u8[4096]{0}', space=vmem, size = 0x1000, scoped, tag = 'output window, operand 2']
    %13 = vsyncpa [#allocation3], 0
    %s14 = scalar_lea.sflag [#allocation3], 1
    %15 = vsyncpa %s14, 0
    %16 = vsyncpa [#allocation6], 0
    %17 = vsyncpa [#allocation4], 0
    %s18 = scalar_lea.sflag [#allocation4], 1
    %19 = vsyncpa %s18, 0
    %20 = vsyncpa [#allocation9], 0
    %s21 = scalar_lea.sflag [#allocation9], 1
    %22 = vsyncpa %s21, 0
    loop: start=0, step=1, limit=4
    $region2: #{tpu_custom_call.1} parent=1 // loop_pre_header
      _
    $region3: #{tpu_custom_call.1} parent=1 // loop_header
      %s24 = sphi 0, %s28
      %p25 = scmp.ge.s32.totalorder %s24, 4
      %s31 = sphi 0, %s43
      %s32 = sphi 0, %s39
      %s33 = sphi 0, %s31
      %s34 = sphi 0, %s32
      %s35 = sphi 0, %s33
      %s36 = sphi 0, %s34
      %s48 = sphi 0, %s50
      %s51 = sphi 0, %s48
      %s52 = sphi 0, %s51
      %s68 = sphi 0, %s52
      %s72 = sphi 0, %s72
      %s74 = sphi 0, %s72
      %s75 = sphi 0, %s74
      %s89 = sphi 0, %s75
      %s93 = sphi 0, %s93
      %s95 = sphi 0, %s93
      %s96 = sphi 0, %s95
      %s110 = sphi 0, %s96
      %s114 = sphi 0, %s114
      %s116 = sphi 0, %s114
      %s117 = sphi 0, %s116
      %s131 = sphi 0, %s117
      %s135 = sphi 0, %s135
      %s137 = sphi 0, %s135
      %s138 = sphi 0, %s137
      %s152 = sphi 0, %s138
      %s160 = sphi 0, %s162
      %s163 = sphi 0, %s160
      %s164 = sphi 0, %s163
      %s180 = sphi 0, %s164
      %s188 = sphi 0, %s190
      %s191 = sphi 0, %s188
      %s192 = sphi 0, %s191
      %s208 = sphi 0, %s192
      %s216 = sphi 0, %s218
      %s219 = sphi 0, %s216
      %s220 = sphi 0, %s219
      %s236 = sphi 0, %s220
    $region4: #{tpu_custom_call.1} parent=1 // loop_header_branch
      %27 = sbr.rel (%p25) target = $region8
    $region5: #{tpu_custom_call.1} parent=1 // loop_body
      %s29 = ssub.s32 %s24, 1
      %s30 = ssub.s32 %s24, 2
      %s37 = sadd.s32 1, %s32
      %p38 = scmp.ge.s32.totalorder %s37, 1
      %s39 = scalar_select %p38, 0, %s37
      %s40 = sadd.s32 1, %s31
      %s41 = scalar_select %p38, %s40, %s31
      %p42 = scmp.ge.s32.totalorder %s41, 2
      %s43 = scalar_select %p42, 0, %s41
      %s44 = ssub.s32 %s31, %s43
      %s45 = ssub.s32 %s32, %s39
      %s46 = sor.u32 %s44, %s45
      %p47 = scmp.eq.s32.totalorder %s46, 0
      %s49 = sadd.s32 %s48, 1
      %s50 = scalar_select %p47, %s48, %s49
      %p53 = pneg %p47
      %p54 = scmp.eq.s32.totalorder %s24, 1
      %p55 = por %p53, %p54
      %p56 = scmp.ne.s32.totalorder %s48, %s51
      %p57 = scmp.eq.s32.totalorder %s24, 0
      %p58 = por %p56, %p57
      %p59 = scmp.ne.s32.totalorder %s48, %s51
      %p60 = scmp.eq.s32.totalorder %s29, 1
      %p61 = por %p59, %p60
      %p62 = scmp.ne.s32.totalorder %s51, %s52
      %p63 = scmp.eq.s32.totalorder %s29, 0
      %p64 = por %p62, %p63
      %p65 = scmp.ne.s32.totalorder %s51, %s52
      %p66 = scmp.eq.s32.totalorder %s30, 1
      %p67 = por %p65, %p66
      %p69 = scmp.ne.s32.totalorder %s52, %s68
      %p70 = scmp.eq.s32.totalorder %s30, 0
      %p71 = por %p69, %p70
      %s73 = sadd.s32 %s72, 1
      %p76 = scmp.eq.s32.totalorder %s24, 1
      %p77 = scmp.ne.s32.totalorder %s72, %s74
      %p78 = scmp.eq.s32.totalorder %s24, 0
      %p79 = por %p77, %p78
      %p80 = scmp.ne.s32.totalorder %s72, %s74
      %p81 = scmp.eq.s32.totalorder %s29, 1
      %p82 = por %p80, %p81
      %p83 = scmp.ne.s32.totalorder %s74, %s75
      %p84 = scmp.eq.s32.totalorder %s29, 0
      %p85 = por %p83, %p84
      %p86 = scmp.ne.s32.totalorder %s74, %s75
      %p87 = scmp.eq.s32.totalorder %s30, 1
      %p88 = por %p86, %p87
      %p90 = scmp.ne.s32.totalorder %s75, %s89
      %p91 = scmp.eq.s32.totalorder %s30, 0
      %p92 = por %p90, %p91
      %s94 = sadd.s32 %s93, 1
      %p97 = scmp.eq.s32.totalorder %s24, 1
      %p98 = scmp.ne.s32.totalorder %s93, %s95
      %p99 = scmp.eq.s32.totalorder %s24, 0
      %p100 = por %p98, %p99
      %p101 = scmp.ne.s32.totalorder %s93, %s95
      %p102 = scmp.eq.s32.totalorder %s29, 1
      %p103 = por %p101, %p102
      %p104 = scmp.ne.s32.totalorder %s95, %s96
      %p105 = scmp.eq.s32.totalorder %s29, 0
      %p106 = por %p104, %p105
      %p107 = scmp.ne.s32.totalorder %s95, %s96
      %p108 = scmp.eq.s32.totalorder %s30, 1
      %p109 = por %p107, %p108
      %p111 = scmp.ne.s32.totalorder %s96, %s110
      %p112 = scmp.eq.s32.totalorder %s30, 0
      %p113 = por %p111, %p112
      %s115 = sadd.s32 %s114, 1
      %p118 = scmp.eq.s32.totalorder %s24, 1
      %p119 = scmp.ne.s32.totalorder %s114, %s116
      %p120 = scmp.eq.s32.totalorder %s24, 0
      %p121 = por %p119, %p120
      %p122 = scmp.ne.s32.totalorder %s114, %s116
      %p123 = scmp.eq.s32.totalorder %s29, 1
      %p124 = por %p122, %p123
      %p125 = scmp.ne.s32.totalorder %s116, %s117
      %p126 = scmp.eq.s32.totalorder %s29, 0
      %p127 = por %p125, %p126
      %p128 = scmp.ne.s32.totalorder %s116, %s117
      %p129 = scmp.eq.s32.totalorder %s30, 1
      %p130 = por %p128, %p129
      %p132 = scmp.ne.s32.totalorder %s117, %s131
      %p133 = scmp.eq.s32.totalorder %s30, 0
      %p134 = por %p132, %p133
      %s136 = sadd.s32 %s135, 1
      %p139 = scmp.eq.s32.totalorder %s24, 1
      %p140 = scmp.ne.s32.totalorder %s135, %s137
      %p141 = scmp.eq.s32.totalorder %s24, 0
      %p142 = por %p140, %p141
      %p143 = scmp.ne.s32.totalorder %s135, %s137
      %p144 = scmp.eq.s32.totalorder %s29, 1
      %p145 = por %p143, %p144
      %p146 = scmp.ne.s32.totalorder %s137, %s138
      %p147 = scmp.eq.s32.totalorder %s29, 0
      %p148 = por %p146, %p147
      %p149 = scmp.ne.s32.totalorder %s137, %s138
      %p150 = scmp.eq.s32.totalorder %s30, 1
      %p151 = por %p149, %p150
      %p153 = scmp.ne.s32.totalorder %s138, %s152
      %p154 = scmp.eq.s32.totalorder %s30, 0
      %p155 = por %p153, %p154
      %s156 = ssub.s32 %s31, %s43
      %s157 = ssub.s32 %s32, %s39
      %s158 = sor.u32 %s156, %s157
      %p159 = scmp.eq.s32.totalorder %s158, 0
      %s161 = sadd.s32 %s160, 1
      %s162 = scalar_select %p159, %s160, %s161
      %p165 = pneg %p159
      %p166 = scmp.eq.s32.totalorder %s24, 1
      %p167 = por %p165, %p166
      %p168 = scmp.ne.s32.totalorder %s160, %s163
      %p169 = scmp.eq.s32.totalorder %s24, 0
      %p170 = por %p168, %p169
      %p171 = scmp.ne.s32.totalorder %s160, %s163
      %p172 = scmp.eq.s32.totalorder %s29, 1
      %p173 = por %p171, %p172
      %p174 = scmp.ne.s32.totalorder %s163, %s164
      %p175 = scmp.eq.s32.totalorder %s29, 0
      %p176 = por %p174, %p175
      %p177 = scmp.ne.s32.totalorder %s163, %s164
      %p178 = scmp.eq.s32.totalorder %s30, 1
      %p179 = por %p177, %p178
      %p181 = scmp.ne.s32.totalorder %s164, %s180
      %p182 = scmp.eq.s32.totalorder %s30, 0
      %p183 = por %p181, %p182
      %s184 = ssub.s32 %s31, %s43
      %s185 = ssub.s32 %s32, %s39
      %s186 = sor.u32 %s184, %s185
      %p187 = scmp.eq.s32.totalorder %s186, 0
      %s189 = sadd.s32 %s188, 1
      %s190 = scalar_select %p187, %s188, %s189
      %p193 = pneg %p187
      %p194 = scmp.eq.s32.totalorder %s24, 1
      %p195 = por %p193, %p194
      %p196 = scmp.ne.s32.totalorder %s188, %s191
      %p197 = scmp.eq.s32.totalorder %s24, 0
      %p198 = por %p196, %p197
      %p199 = scmp.ne.s32.totalorder %s188, %s191
      %p200 = scmp.eq.s32.totalorder %s29, 1
      %p201 = por %p199, %p200
      %p202 = scmp.ne.s32.totalorder %s191, %s192
      %p203 = scmp.eq.s32.totalorder %s29, 0
      %p204 = por %p202, %p203
      %p205 = scmp.ne.s32.totalorder %s191, %s192
      %p206 = scmp.eq.s32.totalorder %s30, 1
      %p207 = por %p205, %p206
      %p209 = scmp.ne.s32.totalorder %s192, %s208
      %p210 = scmp.eq.s32.totalorder %s30, 0
      %p211 = por %p209, %p210
      %s212 = ssub.s32 %s31, %s43
      %s213 = ssub.s32 %s32, %s39
      %s214 = sor.u32 %s212, %s213
      %p215 = scmp.eq.s32.totalorder %s214, 0
      %s217 = sadd.s32 %s216, 1
      %s218 = scalar_select %p215, %s216, %s217
      %p221 = pneg %p215
      %p222 = scmp.eq.s32.totalorder %s24, 1
      %p223 = por %p221, %p222
      %p224 = scmp.ne.s32.totalorder %s216, %s219
      %p225 = scmp.eq.s32.totalorder %s24, 0
      %p226 = por %p224, %p225
      %p227 = scmp.ne.s32.totalorder %s216, %s219
      %p228 = scmp.eq.s32.totalorder %s29, 1
      %p229 = por %p227, %p228
      %p230 = scmp.ne.s32.totalorder %s219, %s220
      %p231 = scmp.eq.s32.totalorder %s29, 0
      %p232 = por %p230, %p231
      %p233 = scmp.ne.s32.totalorder %s219, %s220
      %p234 = scmp.eq.s32.totalorder %s30, 1
      %p235 = por %p233, %p234
      %p237 = scmp.ne.s32.totalorder %s220, %s236
      %p238 = scmp.eq.s32.totalorder %s30, 0
      %p239 = por %p237, %p238
      %p240 = scmp.le.s32.totalorder 1, %s24
      %p241 = scmp.lt.s32.totalorder %s24, 3
      %p242 = pnand %p240, %p241
      %p243 = pneg %p242
      // Predicated region
      $region9: #{tpu_custom_call.1} parent=5 // pred_check
        _
      $region10: #{tpu_custom_call.1} parent=5 // pred_check_branch
        %245 = sbr.rel (%p242) target = $region12
      $region11: #{tpu_custom_call.1} parent=5 // pred_region
        %s246 = ssub.s32 %s24, 1
        // Predicated region
        $region13: #{tpu_custom_call.1} parent=11 // pred_check
          %p247 = pneg %p85
        $region14: #{tpu_custom_call.1} parent=11 // pred_check_branch
          %249 = sbr.rel (%p247) target = $region16
        $region15: #{tpu_custom_call.1} parent=11 // pred_region
          _
        $region16: #{tpu_custom_call.1} parent=11 // pred_fallthru
          _
        // Predicated region
        $region17: #{tpu_custom_call.1} parent=11 // pred_check
          %p250 = pneg %p106
        $region18: #{tpu_custom_call.1} parent=11 // pred_check_branch
          %252 = sbr.rel (%p250) target = $region20
        $region19: #{tpu_custom_call.1} parent=11 // pred_region
          _
        $region20: #{tpu_custom_call.1} parent=11 // pred_fallthru
          _
        // Predicated region
        $region21: #{tpu_custom_call.1} parent=11 // pred_check
          %p253 = pneg %p127
        $region22: #{tpu_custom_call.1} parent=11 // pred_check_branch
          %255 = sbr.rel (%p253) target = $region24
        $region23: #{tpu_custom_call.1} parent=11 // pred_region
          %s257 = ssub.s32 256, 256
          %258 = vsyncadd [#allocation6], %s257
          %s259 = sshll.u32 [#allocation5], 4
          %s260 = int_to_ptr.vmem [resolvable:$true] %s259
          %265 = dma.hbm_to_vmem [thread:$0]  %s3, 256, %s260, [#allocation6], 64, 64, 4
        $region24: #{tpu_custom_call.1} parent=11 // pred_fallthru
          _
        // Predicated region
        $region25: #{tpu_custom_call.1} parent=11 // pred_check
          %p266 = pneg %p148
        $region26: #{tpu_custom_call.1} parent=11 // pred_check_branch
          %268 = sbr.rel (%p266) target = $region28
        $region27: #{tpu_custom_call.1} parent=11 // pred_region
          _
        $region28: #{tpu_custom_call.1} parent=11 // pred_fallthru
          _
      $region12: #{tpu_custom_call.1} parent=5 // pred_fallthru
        _
      %p269 = scmp.lt.s32.totalorder %s24, 2
      // Predicated region
      $region29: #{tpu_custom_call.1} parent=5 // pred_check
        %p270 = pneg %p269
      $region30: #{tpu_custom_call.1} parent=5 // pred_check_branch
        %272 = sbr.rel (%p270) target = $region32
      $region31: #{tpu_custom_call.1} parent=5 // pred_region
        // Predicated region
        $region33: #{tpu_custom_call.1} parent=31 // pred_check
          %p273 = pneg %p58
        $region34: #{tpu_custom_call.1} parent=31 // pred_check_branch
          %275 = sbr.rel (%p273) target = $region36
        $region35: #{tpu_custom_call.1} parent=31 // pred_region
          %s276 = sand.u32 %s48, 1
          %s277 = scalar_lea.sflag [#allocation3], %s276
          %s278 = sand.u32 %s48, 1
          %s279 = smul.addr %s278, 8
          %s280 = scalar_lea.vmem [#allocation2], %s279
          %s282 = ssub.s32 128, 128
          %283 = vsyncadd %s277, %s282
          %s284 = sadd.s32 %s32, %s31
          %s285 = smul.addr %s284, 128
          %s286 = scalar_lea.hbm %s0, %s285
          %s288 = sshll.u32 %s280, 4
          %s289 = int_to_ptr.vmem [resolvable:$true] %s288
          %291 = dma.hbm_to_vmem [thread:$0]  %s286, 128, %s289, %s277
        $region36: #{tpu_custom_call.1} parent=31 // pred_fallthru
          _
      $region32: #{tpu_custom_call.1} parent=5 // pred_fallthru
        _
      %p292 = scmp.le.s32.totalorder 1, %s24
      %p293 = scmp.lt.s32.totalorder %s24, 3
      %p294 = pnand %p292, %p293
      %p295 = pneg %p294
      // Predicated region
      $region37: #{tpu_custom_call.1} parent=5 // pred_check
        _
      $region38: #{tpu_custom_call.1} parent=5 // pred_check_branch
        %297 = sbr.rel (%p294) target = $region40
      $region39: #{tpu_custom_call.1} parent=5 // pred_region
        %s298 = ssub.s32 %s24, 1
        %s299 = sand.u32 %s51, 1
        %s300 = scalar_lea.sflag [#allocation3], %s299
        %s301 = sand.u32 %s51, 1
        %s302 = smul.addr %s301, 8
        %s303 = scalar_lea.vmem [#allocation2], %s302
        // Predicated region
        $region41: #{tpu_custom_call.1} parent=39 // pred_check
          %p304 = pneg %p64
        $region42: #{tpu_custom_call.1} parent=39 // pred_check_branch
          %306 = sbr.rel (%p304) target = $region44
        $region43: #{tpu_custom_call.1} parent=39 // pred_region
          %307 = dma.done %s300, 128
        $region44: #{tpu_custom_call.1} parent=39 // pred_fallthru
          _
        // Predicated region
        $region45: #{tpu_custom_call.1} parent=39 // pred_check
          %p308 = pneg %p127
        $region46: #{tpu_custom_call.1} parent=39 // pred_check_branch
          %310 = sbr.rel (%p308) target = $region48
        $region47: #{tpu_custom_call.1} parent=39 // pred_region
          %311 = dma.done [#allocation6], 256
        $region48: #{tpu_custom_call.1} parent=39 // pred_fallthru
          _
        %s312 = sand.u32 %s51, 1
        %s313 = scalar_lea.sflag [#allocation3], %s312
        %s314 = sand.u32 %s51, 1
        %s315 = smul.addr %s314, 8
        %s316 = scalar_lea.vmem [#allocation2], %s315
        %p317 = pneg %p64
        %p318 = pneg %p61
        %p319 = pneg %p85
        %p320 = pneg %p82
        %p321 = pneg %p106
        %p322 = pneg %p103
        %p323 = pneg %p127
        %p324 = pneg %p124
        %p325 = pneg %p148
        %p326 = pneg %p145
        %p327 = pneg %p176
        %p328 = pneg %p173
        %s329 = sand.u32 %s163, 1
        %s330 = scalar_lea.sflag [#allocation4], %s329
        %s331 = sand.u32 %s163, 1
        %s332 = smul.addr %s331, 4
        %s333 = scalar_lea.vmem [#allocation7], %s332
        %p334 = pneg %p204
        %p335 = pneg %p201
        %s336 = sand.u32 %s29, 1
        %s337 = scalar_lea.sflag [#allocation9], %s336
        %s338 = sand.u32 %s191, 1
        %s339 = smul.addr %s338, 4
        %s340 = scalar_lea.vmem [#allocation8], %s339
        %p341 = pneg %p232
        %p342 = pneg %p229
        %s343 = sand.u32 %s29, 1
        %s344 = scalar_lea.sflag [#allocation9], %s343
        %s345 = sand.u32 %s219, 1
        %s346 = smul.addr %s345, 4
        %s347 = scalar_lea.vmem [#allocation10], %s346
        %v349 = vld [vmem:[%s303] sm:$0xff]
        %v350 = vld [vmem:[%s1] sm:$0x1]
        %v351 = vld [vmem:[%s2] sm:$0x1]
        %vm352 = vcmask 261120
        %v353 = vsel %vm352, %v349, 0.0
        %354 = vadd.xlane.f32.xlu0 %v353
        %v355 = vpop.xlane.xlu0 %354
        %v356 = vrcp.pop 32.0
        %v357 = vmul.f32 %v355, %v356
        %v358 = vsub.f32 %v349, %v357
        %v359 = vmul.f32 %v358, %v358
        %v360 = vsel %vm352, %v359, 0.0
        %361 = vadd.xlane.f32.xlu0 %v360
        %v362 = vpop.xlane.xlu0 %361
        %v363 = vmul.f32 %v362, %v356
        %v364 = vadd.f32 %v363, 1e-05
        %v365 = vrsqrt.pop %v364
        %v366 = vmul.f32 %v358, %v365
        %v368 = vlaneseq
        %v369 = vshrl.u32 %v368, 7
        %v370 = vsub.s32 0, %v369
        %v371 = vrot.slane %v350, %v370
        %v373 = vmul.f32 %v366, %v371
        %v375 = vlaneseq
        %v376 = vshrl.u32 %v375, 7
        %v377 = vsub.s32 0, %v376
        %v378 = vrot.slane %v351, %v377
        %v380 = vadd.f32 %v373, %v378
        %v381 = vpack.c.bf16 %v380, %v380
        %v382 = vld [vmem:[#allocation5] sm:$0xf]
        %v383 = vld [vmem:[#allocation5 + $0x4] sm:$0xf]
        %v384 = vld [vmem:[#allocation5 + $0x8] sm:$0xf]
        %v385 = vld [vmem:[#allocation5 + $0xc] sm:$0xf]
        %v386 = vld [vmem:[%s4] sm:$0x1]
        %v388 = vlaneseq
        %v389 = vshrl.u32 %v388, 7
        %v390 = vsub.s32 0, %v389
        %v391 = vrot.slane %v386, %v390
        %v397 = vunpack.c.l.b16 %v382
        %v398 = vunpack.c.l.b16 %v383
        %v399 = vunpack.c.l.b16 %v384
        %v400 = vunpack.c.l.b16 %v385
        %v401 = vpack.c.b16 %v398, %v397
        %v402 = vpack.c.b16 %v400, %v399
        %v406 = vsel %vm352, %v381, 0
        %408 = vmatprep.subr.bf16.mxu0 0
        %409 = vmatpush1.bf16.msra.mxu0 %v401
        %410 = vmatprep.subr.bf16.mxu0 0
        %411 = vmatpush1.bf16.msra.mxu0 %v402
        %412 = vmatprep.subr.bf16.mxu0 0
        %413 = vmatpush1.bf16.msra.mxu0 0
        %414 = vmatprep.subr.bf16.mxu0 0
        %415 = vmatpush1.bf16.msra.mxu0 0
        %416 = vmatprep.subr.bf16.mxu0 0
        %417 = vmatpush1.bf16.msra.mxu0 0
        %418 = vmatprep.subr.bf16.mxu0 0
        %419 = vmatpush1.bf16.msra.mxu0 0
        %420 = vmatprep.subr.bf16.mxu0 0
        %421 = vmatpush1.bf16.msra.mxu0 0
        %422 = vmatprep.subr.bf16.mxu0 0
        %423 = vmatpush1.bf16.msra.mxu0 0
        %424 = vmatprep.subr.bf16.mxu0 0
        %425 = vmatpush1.bf16.msra.mxu0 0
        %426 = vmatprep.subr.bf16.mxu0 0
        %427 = vmatpush1.bf16.msra.mxu0 0
        %428 = vmatprep.subr.bf16.mxu0 0
        %429 = vmatpush1.bf16.msra.mxu0 0
        %430 = vmatprep.subr.bf16.mxu0 0
        %431 = vmatpush1.bf16.msra.mxu0 0
        %432 = vmatprep.subr.bf16.mxu0 0
        %433 = vmatpush1.bf16.msra.mxu0 0
        %434 = vmatprep.subr.bf16.mxu0 0
        %435 = vmatpush1.bf16.msra.mxu0 0
        %436 = vmatprep.subr.bf16.mxu0 0
        %437 = vmatpush1.bf16.msra.mxu0 0
        %438 = vmatprep.subr.bf16.mxu0 0
        %439 = vmatpush1.bf16.msra.mxu0 0
        %440 = vmatprep.mubr.bf16.mxu0 0
        %441 = vmatmul.mubr.bf16.gmra.mrb[0].mxu0 %v406
        %v442 = vpop.f32.mrb[0].mxu0
        %v443 = vadd.f32 %v391, %v442
        %v444 = vpop.f32.mrb[0].mxu0
        %v445 = vpop.f32.mrb[0].mxu0
        %v446 = vpop.f32.mrb[0].mxu0
        %447 = vdwg.mxu0
        %v448 = vpack.c.bf16 %v443, %v443
        %vm449 = vcmask 257024
        %450 = vst.msk [vmem:[%s333] sm:$0xf] %vm449, %v448
        %v452 = vunpack.c.l.b16 %v448
        %v453 = vpack.c.b16 %v452, %v452
        %454 = vrot.lane.b32.xlu0 %v453, 96
        %v455 = vpop.permute.xlu0 %454
        %457 = vst.msk [vmem:[%s340] sm:$0xf] %vm449, %v455
        %458 = vrot.lane.b32.xlu0 %v453, 64
        %v459 = vpop.permute.xlu0 %458
        %461 = vst.msk [vmem:[%s347] sm:$0xf] %vm449, %v459
        %s462 = sand.u32 %s163, 1
        %s463 = scalar_lea.sflag [#allocation4], %s462
        %s464 = sand.u32 %s163, 1
        %s465 = smul.addr %s464, 4
        %s466 = scalar_lea.vmem [#allocation7], %s465
        %s467 = sand.u32 %s29, 1
        %s468 = scalar_lea.sflag [#allocation9], %s467
        %s469 = sand.u32 %s191, 1
        %s470 = smul.addr %s469, 4
        %s471 = scalar_lea.vmem [#allocation8], %s470
        %s472 = sand.u32 %s29, 1
        %s473 = scalar_lea.sflag [#allocation9], %s472
        %s474 = sand.u32 %s219, 1
        %s475 = smul.addr %s474, 4
        %s476 = scalar_lea.vmem [#allocation10], %s475
        // Predicated region
        $region49: #{tpu_custom_call.1} parent=39 // pred_check
          %p477 = pneg %p173
        $region50: #{tpu_custom_call.1} parent=39 // pred_check_branch
          %479 = sbr.rel (%p477) target = $region52
        $region51: #{tpu_custom_call.1} parent=39 // pred_region
          %s481 = ssub.s32 64, 64
          %482 = vsyncadd %s463, %s481
          %s483 = sadd.s32 %s34, %s33
          %s484 = smul.addr %s483, 64
          %s485 = scalar_lea.hbm %s5, %s484
          %s487 = sshll.u32 %s466, 4
          %s488 = int_to_ptr.vmem [resolvable:$true] %s487
          %490 = dma.vmem_to_hbm [thread:$0]  %s488, 64, %s485, %s463
        $region52: #{tpu_custom_call.1} parent=39 // pred_fallthru
          _
        // Predicated region
        $region53: #{tpu_custom_call.1} parent=39 // pred_check
          %p491 = pneg %p201
        $region54: #{tpu_custom_call.1} parent=39 // pred_check_branch
          %493 = sbr.rel (%p491) target = $region56
        $region55: #{tpu_custom_call.1} parent=39 // pred_region
          %s495 = ssub.s32 64, 64
          %496 = vsyncadd %s468, %s495
          %s497 = sadd.s32 %s34, %s33
          %s498 = smul.addr %s497, 64
          %s499 = scalar_lea.hbm %s6, %s498
          %s501 = sshll.u32 %s471, 4
          %s502 = int_to_ptr.vmem [resolvable:$true] %s501
          %504 = dma.vmem_to_hbm [thread:$0]  %s502, 64, %s499, %s468
        $region56: #{tpu_custom_call.1} parent=39 // pred_fallthru
          _
        // Predicated region
        $region57: #{tpu_custom_call.1} parent=39 // pred_check
          %p505 = pneg %p229
        $region58: #{tpu_custom_call.1} parent=39 // pred_check_branch
          %507 = sbr.rel (%p505) target = $region60
        $region59: #{tpu_custom_call.1} parent=39 // pred_region
          %s509 = ssub.s32 64, 64
          %510 = vsyncadd %s473, %s509
          %s511 = sadd.s32 %s34, %s33
          %s512 = smul.addr %s511, 64
          %s513 = scalar_lea.hbm %s7, %s512
          %s515 = sshll.u32 %s476, 4
          %s516 = int_to_ptr.vmem [resolvable:$true] %s515
          %518 = dma.vmem_to_hbm [thread:$0]  %s516, 64, %s513, %s473
        $region60: #{tpu_custom_call.1} parent=39 // pred_fallthru
          _
      $region40: #{tpu_custom_call.1} parent=5 // pred_fallthru
        _
      %p519 = scmp.le.s32.totalorder 2, %s24
      // Predicated region
      $region61: #{tpu_custom_call.1} parent=5 // pred_check
        %p520 = pneg %p519
      $region62: #{tpu_custom_call.1} parent=5 // pred_check_branch
        %522 = sbr.rel (%p520) target = $region64
      $region63: #{tpu_custom_call.1} parent=5 // pred_region
        %s523 = ssub.s32 %s24, 2
        // Predicated region
        $region65: #{tpu_custom_call.1} parent=63 // pred_check
          %p524 = pneg %p179
        $region66: #{tpu_custom_call.1} parent=63 // pred_check_branch
          %526 = sbr.rel (%p524) target = $region68
        $region67: #{tpu_custom_call.1} parent=63 // pred_region
          %s527 = sand.u32 %s164, 1
          %s528 = scalar_lea.sflag [#allocation4], %s527
          %s529 = sand.u32 %s164, 1
          %s530 = smul.addr %s529, 4
          %s531 = scalar_lea.vmem [#allocation7], %s530
          %532 = dma.done %s528, 64
        $region68: #{tpu_custom_call.1} parent=63 // pred_fallthru
          _
        // Predicated region
        $region69: #{tpu_custom_call.1} parent=63 // pred_check
          %p533 = pneg %p207
        $region70: #{tpu_custom_call.1} parent=63 // pred_check_branch
          %535 = sbr.rel (%p533) target = $region72
        $region71: #{tpu_custom_call.1} parent=63 // pred_region
          %s536 = sand.u32 %s30, 1
          %s537 = scalar_lea.sflag [#allocation9], %s536
          %s538 = sand.u32 %s192, 1
          %s539 = smul.addr %s538, 4
          %s540 = scalar_lea.vmem [#allocation8], %s539
          %541 = dma.done %s537, 64
        $region72: #{tpu_custom_call.1} parent=63 // pred_fallthru
          _
        // Predicated region
        $region73: #{tpu_custom_call.1} parent=63 // pred_check
          %p542 = pneg %p235
        $region74: #{tpu_custom_call.1} parent=63 // pred_check_branch
          %544 = sbr.rel (%p542) target = $region76
        $region75: #{tpu_custom_call.1} parent=63 // pred_region
          %s545 = sand.u32 %s30, 1
          %s546 = scalar_lea.sflag [#allocation9], %s545
          %s547 = sand.u32 %s220, 1
          %s548 = smul.addr %s547, 4
          %s549 = scalar_lea.vmem [#allocation10], %s548
          %550 = dma.done %s546, 64
        $region76: #{tpu_custom_call.1} parent=63 // pred_fallthru
          _
      $region64: #{tpu_custom_call.1} parent=5 // pred_fallthru
        _
    $region6: #{tpu_custom_call.1} parent=1 // loop_footer
      %s28 = sadd.s32 1, %s24
    $region7: #{tpu_custom_call.1} parent=1 // loop_footer_branch
      %23 = sbr.rel target = $region3
    $region8: #{tpu_custom_call.1} parent=1 // loop_exit
      _
    %551 = vsyncpa [#allocation3], 1
    %s552 = scalar_lea.sflag [#allocation3], 1
    %553 = vsyncpa %s552, 1
    %554 = vsyncpa [#allocation6], 1
    %555 = vsyncpa [#allocation4], 1
    %s556 = scalar_lea.sflag [#allocation4], 1
    %557 = vsyncpa %s556, 1
    %558 = vsyncpa [#allocation9], 1
    %s559 = scalar_lea.sflag [#allocation9], 1
    %560 = vsyncpa %s559, 1

</llo_original>
